<compile_context>
chip_gen: v6e
topology: v6e:2x2x1
jax: 0.10.0
libtpu: 0.0.40
codegen_flags: <defaults>
</compile_context>

<pallas_src>
import functools

import jax
import jax.numpy as jnp
from jax.experimental import pallas as pl
from jax.experimental.pallas import tpu as pltpu

NUM_MODAL = 3
# Ordered pairs in PyTorch loop order: (0,1),(0,2),(1,0),(1,2),(2,0),(2,1)
PAIRS = tuple((i, j) for i in range(NUM_MODAL) for j in range(NUM_MODAL) if i != j)
NUM_PAIRS = len(PAIRS)                                              # 6
# Unordered pairs; each product hx[a]*hx[b] feeds both ordered pairs (a,b),(b,a).
UPAIRS = tuple((a, b) for a in range(NUM_MODAL) for b in range(a + 1, NUM_MODAL))  # 3
NUM_RHS_BLOCKS = NUM_MODAL + len(UPAIRS)                            # 6 slab row-blocks


def _mm_gated_attention_kernel(x_ref, wm_ref, bm_ref, wbig_ref, bc_ref,
                               out_ref, rhs_ref, *, gate_dtype, approx_sigmoid):
    """One row tile: x_ref (nm, tm, mem) -> out_ref (nm, tm, cand)."""
    cand = out_ref.shape[2]
    mm_dtype = wbig_ref.dtype  # gate-matmul input dtype (bf16 by default)

    # ---- Stage 1: hx^T = relu(x @ Wm + bm)^T, kept lane-dense (cand, tm). ----
    # Matmul runs in x's natural (tm, mem) layout (no input transpose); only the
    # small (tm, cand) result is transposed on the XLU.  Dropout == identity.
    hxT = []
    for m in range(NUM_MODAL):
        h = jnp.dot(x_ref[m], wm_ref[m], preferred_element_type=jnp.float32)  # (tm, cand)
        hT = jnp.transpose(h)                                   # (cand, tm), XLU
        hT = jnp.maximum(hT + bm_ref[m], 0.0)                   # lane-dense bias + relu
        hxT.append(hT.astype(gate_dtype))
        rhs_ref[m * cand:(m + 1) * cand, :] = hT.astype(mm_dtype)
    for u, (a, b) in enumerate(UPAIRS):
        prod = hxT[a] * hxT[b]                                   # reused by (a,b) and (b,a)
        rhs_ref[(NUM_MODAL + u) * cand:(NUM_MODAL + u + 1) * cand, :] = prod.astype(mm_dtype)

    # ---- Stage 2a: all 6 gate pre-activations in ONE MXU call (K = 6*cand). ----
    s_slab = jnp.dot(wbig_ref[...], rhs_ref[...],
                     preferred_element_type=jnp.float32) + bc_ref[...]   # (6*cand, tm) f32
    if approx_sigmoid:
        # EUP-shaped sigmoid: exp + approximate reciprocal both land on the EUP slot.
        z_slab = pl.reciprocal(1.0 + jnp.exp(-s_slab), approx=True)
    else:
        z_slab = jax.nn.sigmoid(s_slab)
    z_slab = z_slab.astype(gate_dtype)
    z = [z_slab[p * cand:(p + 1) * cand, :] for p in range(NUM_PAIRS)]
    # PAIRS order -> z = [z01, z02, z10, z12, z20, z21]

    # ---- Stage 2b: out_i^T = (S - hx_i^T) + sum_{j!=i} z_ij * (hx_i^T - hx_j^T). ----
    S = hxT[0] + hxT[1] + hxT[2]
    d01 = hxT[0] - hxT[1]
    d02 = hxT[0] - hxT[2]
    d12 = hxT[1] - hxT[2]
    o0 = (S - hxT[0]) + z[0] * d01 + z[1] * d02
    o1 = (S - hxT[1]) - z[2] * d01 + z[3] * d12
    o2 = (S - hxT[2]) - z[4] * d02 - z[5] * d12
    for i, o in enumerate((o0, o1, o2)):
        # Back to the natural (tm, cand) layout for the store (lane-masked, since
        # cand=32 < 128 — unavoidable without changing the output API layout).
        out_ref[i] = jnp.transpose(o.astype(jnp.float32)).astype(out_ref.dtype)


def _default_gate_dtype():
    """bf16 elementwise gating only where the VPU/EUP are bf16-native (v6e/v7x)."""
    try:
        kind = jax.devices()[0].device_kind.lower()
    except Exception:
        return jnp.float32
    if "v6" in kind or "v7" in kind or "tpu7" in kind or "7x" in kind:
        return jnp.bfloat16
    return jnp.float32


def mm_gated_attention(x, wm, bm, wc, bc, *, tm=None,
                       matmul_dtype=jnp.bfloat16, gate_dtype=None,
                       out_dtype=None, approx_sigmoid=True):
    """Fused MMGatedAttention forward (eval mode).

    x  : (num_modal, M, mem_dim)            natural layout, any float dtype
    wm : (num_modal, mem_dim, cand_dim)     pre-transposed nn.Linear weights (y = x@W + b)
    bm : (num_modal, cand_dim)
    wc : (num_pairs, 3*cand_dim, cand_dim)  concat order [hx_i, hx_j, hx_i*hx_j]
    bc : (num_pairs, cand_dim)
    Returns (num_modal, M, cand_dim).
    """
    num_modal, M, mem_dim = x.shape
    cand = wm.shape[-1]
    assert num_modal == NUM_MODAL
    assert wm.shape == (NUM_MODAL, mem_dim, cand)
    assert bm.shape == (NUM_MODAL, cand)
    assert wc.shape == (NUM_PAIRS, 3 * cand, cand)
    assert bc.shape == (NUM_PAIRS, cand)

    if gate_dtype is None:
        gate_dtype = _default_gate_dtype()
    if out_dtype is None:
        out_dtype = x.dtype  # v5e users may pass bf16 to halve the output stream

    # Row tile: multiple of 128 (lane width of the in-kernel compute layout),
    # >= 4 grid steps once M is large enough (v7x shards the "parallel" axis
    # over its 2 TensorCores), capped at 2048 to amortize per-step overhead.
    # Tiny problems (M < 128) use a single full block.
    if tm is None:
        tm = M if M < 128 else min(2048, max(128, (M // 4) // 128 * 128))
    else:
        tm = min(tm, M)
        if tm < M:
            tm = max(8, (tm // 8) * 8)

    # ---- host-side parameter prep (tiny arrays; NO HBM pass over x / output) ----
    wm_c = wm.astype(x.dtype)                        # stage-1 matmul runs in x's dtype
    bm_col = bm[:, :, None].astype(jnp.float32)      # (nm, cand, 1)
    bc_big = bc.reshape(NUM_PAIRS * cand, 1).astype(jnp.float32)
    # Block-structured fused gate weight: row-block p=(i,j) has wc_i^T in column
    # block i, wc_j^T in column block j, wc_prod^T in column block 3+u({i,j}).
    wc_split = wc.reshape(NUM_PAIRS, 3, cand, cand)
    zero = jnp.zeros((cand, cand), wc.dtype)
    rows = []
    for p, (i, j) in enumerate(PAIRS):
        u = UPAIRS.index((i, j) if i < j else (j, i))
        blks = [zero] * NUM_RHS_BLOCKS
        blks[i] = wc_split[p, 0].T
        blks[j] = wc_split[p, 1].T
        blks[NUM_MODAL + u] = wc_split[p, 2].T
        rows.append(blks)
    wbig = jnp.block(rows).astype(matmul_dtype)      # (6*cand, 6*cand) = (192, 192)

    kernel = functools.partial(_mm_gated_attention_kernel,
                               gate_dtype=gate_dtype,
                               approx_sigmoid=approx_sigmoid)

    return pl.pallas_call(
        kernel,
        out_shape=jax.ShapeDtypeStruct((NUM_MODAL, M, cand), out_dtype),
        grid_spec=pltpu.PrefetchScalarGridSpec(
            num_scalar_prefetch=0,
            grid=(pl.cdiv(M, tm),),
            in_specs=[
                pl.BlockSpec((NUM_MODAL, tm, mem_dim), lambda r: (0, r, 0)),
                pl.BlockSpec((NUM_MODAL, mem_dim, cand), lambda r: (0, 0, 0)),
                pl.BlockSpec((NUM_MODAL, cand, 1), lambda r: (0, 0, 0)),
                pl.BlockSpec((NUM_RHS_BLOCKS * cand, NUM_RHS_BLOCKS * cand),
                             lambda r: (0, 0)),
                pl.BlockSpec((NUM_PAIRS * cand, 1), lambda r: (0, 0)),
            ],
            out_specs=pl.BlockSpec((NUM_MODAL, tm, cand), lambda r: (0, r, 0)),
            scratch_shapes=[pltpu.VMEM((NUM_RHS_BLOCKS * cand, tm), matmul_dtype)],
        ),
        compiler_params=pltpu.CompilerParams(
            dimension_semantics=("parallel",),
            vmem_limit_bytes=(32 * 1024 * 1024 if tm > 512 else None)),
    )(x, wm_c, bm_col, wbig, bc_big)


def reference(x, wm, bm, wc, bc):
    """Pure-JAX mirror of the PyTorch forward (eval mode)."""
    hx = [jax.nn.relu(x[m] @ wm[m] + bm[m]) for m in range(NUM_MODAL)]
    h_out = []
    p = 0
    for i in range(NUM_MODAL):
        acc = jnp.zeros_like(hx[i])
        for j in range(NUM_MODAL):
            if i == j:
                continue
            cat = jnp.concatenate([hx[i], hx[j], hx[i] * hx[j]], axis=-1)
            z = jax.nn.sigmoid(cat @ wc[p] + bc[p])
            acc = acc + z * hx[i] + (1.0 - z) * hx[j]
            p += 1
        h_out.append(acc)
    return jnp.stack(h_out)


if __name__ == "__main__":
    mem_dim, cand_dim = 48, 32

    key = jax.random.PRNGKey(0)
    k = jax.random.split(key, 6)

    # nn.Linear: y = x @ W.T + b; we store the pre-transposed (in, out) weights.
    wm = jax.random.normal(k[1], (NUM_MODAL, mem_dim, cand_dim), jnp.float32) * 0.1
    bm = jax.random.normal(k[2], (NUM_MODAL, cand_dim), jnp.float32) * 0.1
    wc = jax.random.normal(k[3], (NUM_PAIRS, 3 * cand_dim, cand_dim), jnp.float32) * 0.1
    bc = jax.random.normal(k[4], (NUM_PAIRS, cand_dim), jnp.float32) * 0.1

    # Case 1: batch=2, seq=64 (M=128, single row tile) — exact f32 path, tight check.
    M1 = 2 * 64
    x1 = jax.random.normal(k[0], (NUM_MODAL, M1, mem_dim), jnp.float32)
    ref1 = reference(x1, wm, bm, wc, bc)
    out1 = jax.block_until_ready(
        mm_gated_attention(x1, wm, bm, wc, bc,
                           matmul_dtype=jnp.float32, gate_dtype=jnp.float32,
                           approx_sigmoid=False))
    assert out1.shape == (NUM_MODAL, M1, cand_dim)
    assert jnp.allclose(out1, ref1, atol=2e-5, rtol=2e-5), "f32 mismatch vs reference"

    # Case 2: batch=4, seq=64 (M=256, 2 row tiles / parallel grid) — default
    # performance path (bf16 gate matmul, auto elementwise dtype, EUP sigmoid).
    M2 = 4 * 64
    x2 = jax.random.normal(k[5], (NUM_MODAL, M2, mem_dim), jnp.float32)
    ref2 = reference(x2, wm, bm, wc, bc)
    out2 = jax.block_until_ready(mm_gated_attention(x2, wm, bm, wc, bc))
    assert out2.shape == (NUM_MODAL, M2, cand_dim)
    assert jnp.allclose(out2, ref2, atol=1e-1, rtol=1e-1), "default-path mismatch vs reference"

    print("KERNEL_OK")
</pallas_src>

<mosaic_0001>
module attributes {stable_mosaic.version = 11 : i64} {
  func.func @_mm_gated_attention_kernel(%arg0: i32, %arg1: memref<3x128x48xf32, #tpu.memory_space<vmem>>, %arg2: memref<3x48x32xf32, #tpu.memory_space<vmem>>, %arg3: memref<3x32x1xf32, #tpu.memory_space<vmem>>, %arg4: memref<192x192xf32, #tpu.memory_space<vmem>>, %arg5: memref<192x1xf32, #tpu.memory_space<vmem>>, %arg6: memref<3x128x32xf32, #tpu.memory_space<vmem>>, %arg7: memref<192x128xf32, #tpu.memory_space<vmem>>) attributes {dimension_semantics = [#tpu.dimension_semantics<parallel>], iteration_bounds = array<i64: 1>, scalar_prefetch = 0 : i64, scratch_operands = 1 : i64, tpu.core_type = #tpu.core_type<tc>, window_params = [{transform_indices = @transform_0, window_bounds = array<i64: 3, 128, 48>}, {pipeline_mode = #tpu.pipeline_mode<synchronous>, transform_indices = @transform_1, window_bounds = array<i64: 3, 48, 32>}, {pipeline_mode = #tpu.pipeline_mode<synchronous>, transform_indices = @transform_2, window_bounds = array<i64: 3, 32, 1>}, {pipeline_mode = #tpu.pipeline_mode<synchronous>, transform_indices = @transform_3, window_bounds = array<i64: 192, 192>}, {pipeline_mode = #tpu.pipeline_mode<synchronous>, transform_indices = @transform_4, window_bounds = array<i64: 192, 1>}, {transform_indices = @transform_5, window_bounds = array<i64: 3, 128, 32>}]} {
    %c0 = arith.constant 0 : index
    %c0_0 = arith.constant 0 : index
    %c0_1 = arith.constant 0 : index
    %0 = vector.load %arg1[%c0, %c0_0, %c0_1] : memref<3x128x48xf32, #tpu.memory_space<vmem>>, vector<1x128x48xf32>
    %1 = vector.shape_cast %0 : vector<1x128x48xf32> to vector<128x48xf32>
    %c0_2 = arith.constant 0 : index
    %c0_3 = arith.constant 0 : index
    %c0_4 = arith.constant 0 : index
    %2 = vector.load %arg2[%c0_2, %c0_3, %c0_4] : memref<3x48x32xf32, #tpu.memory_space<vmem>>, vector<1x48x32xf32>
    %3 = vector.shape_cast %2 : vector<1x48x32xf32> to vector<48x32xf32>
    %cst = arith.constant dense<0.000000e+00> : vector<128x32xf32>
    %4 = tpu.matmul %1, %3, %cst {dimension_numbers = #tpu.dot_dimension_numbers<[1], [0], [0], [1], [0, 0, 1, 1], [], []>} : vector<128x48xf32>, vector<48x32xf32>, vector<128x32xf32> -> vector<128x32xf32>
    %5 = tpu.transpose %4, [1, 0] : vector<128x32xf32> -> vector<32x128xf32>
    %c0_5 = arith.constant 0 : index
    %c0_6 = arith.constant 0 : index
    %c0_7 = arith.constant 0 : index
    %6 = vector.load %arg3[%c0_5, %c0_6, %c0_7] : memref<3x32x1xf32, #tpu.memory_space<vmem>>, vector<1x32x1xf32>
    %7 = vector.shape_cast %6 : vector<1x32x1xf32> to vector<32x1xf32>
    %8 = vector.broadcast %7 : vector<32x1xf32> to vector<32x128xf32>
    %9 = arith.addf %5, %8 : vector<32x128xf32>
    %cst_8 = arith.constant 0.000000e+00 : f32
    %10 = vector.broadcast %cst_8 : f32 to vector<32x128xf32>
    %11 = arith.maximumf %9, %10 : vector<32x128xf32>
    %c0_9 = arith.constant 0 : index
    %c0_10 = arith.constant 0 : index
    %12 = vector.load %arg7[%c0_9, %c0_10] : memref<192x128xf32, #tpu.memory_space<vmem>>, vector<32x128xf32>
    tpu.vector_store %arg7[%c0_9, %c0_10], %11 {strides = array<i32>} : memref<192x128xf32, #tpu.memory_space<vmem>>, vector<32x128xf32>,
    %c1 = arith.constant 1 : index
    %c0_11 = arith.constant 0 : index
    %c0_12 = arith.constant 0 : index
    %13 = vector.load %arg1[%c1, %c0_11, %c0_12] : memref<3x128x48xf32, #tpu.memory_space<vmem>>, vector<1x128x48xf32>
    %14 = vector.shape_cast %13 : vector<1x128x48xf32> to vector<128x48xf32>
    %c1_13 = arith.constant 1 : index
    %c0_14 = arith.constant 0 : index
    %c0_15 = arith.constant 0 : index
    %15 = vector.load %arg2[%c1_13, %c0_14, %c0_15] : memref<3x48x32xf32, #tpu.memory_space<vmem>>, vector<1x48x32xf32>
    %16 = vector.shape_cast %15 : vector<1x48x32xf32> to vector<48x32xf32>
    %cst_16 = arith.constant dense<0.000000e+00> : vector<128x32xf32>
    %17 = tpu.matmul %14, %16, %cst_16 {dimension_numbers = #tpu.dot_dimension_numbers<[1], [0], [0], [1], [0, 0, 1, 1], [], []>} : vector<128x48xf32>, vector<48x32xf32>, vector<128x32xf32> -> vector<128x32xf32>
    %18 = tpu.transpose %17, [1, 0] : vector<128x32xf32> -> vector<32x128xf32>
    %c1_17 = arith.constant 1 : index
    %c0_18 = arith.constant 0 : index
    %c0_19 = arith.constant 0 : index
    %19 = vector.load %arg3[%c1_17, %c0_18, %c0_19] : memref<3x32x1xf32, #tpu.memory_space<vmem>>, vector<1x32x1xf32>
    %20 = vector.shape_cast %19 : vector<1x32x1xf32> to vector<32x1xf32>
    %21 = vector.broadcast %20 : vector<32x1xf32> to vector<32x128xf32>
    %22 = arith.addf %18, %21 : vector<32x128xf32>
    %cst_20 = arith.constant 0.000000e+00 : f32
    %23 = vector.broadcast %cst_20 : f32 to vector<32x128xf32>
    %24 = arith.maximumf %22, %23 : vector<32x128xf32>
    %c32 = arith.constant 32 : index
    %c0_21 = arith.constant 0 : index
    %25 = vector.load %arg7[%c32, %c0_21] : memref<192x128xf32, #tpu.memory_space<vmem>>, vector<32x128xf32>
    tpu.vector_store %arg7[%c32, %c0_21], %24 {strides = array<i32>} : memref<192x128xf32, #tpu.memory_space<vmem>>, vector<32x128xf32>,
    %c2 = arith.constant 2 : index
    %c0_22 = arith.constant 0 : index
    %c0_23 = arith.constant 0 : index
    %26 = vector.load %arg1[%c2, %c0_22, %c0_23] : memref<3x128x48xf32, #tpu.memory_space<vmem>>, vector<1x128x48xf32>
    %27 = vector.shape_cast %26 : vector<1x128x48xf32> to vector<128x48xf32>
    %c2_24 = arith.constant 2 : index
    %c0_25 = arith.constant 0 : index
    %c0_26 = arith.constant 0 : index
    %28 = vector.load %arg2[%c2_24, %c0_25, %c0_26] : memref<3x48x32xf32, #tpu.memory_space<vmem>>, vector<1x48x32xf32>
    %29 = vector.shape_cast %28 : vector<1x48x32xf32> to vector<48x32xf32>
    %cst_27 = arith.constant dense<0.000000e+00> : vector<128x32xf32>
    %30 = tpu.matmul %27, %29, %cst_27 {dimension_numbers = #tpu.dot_dimension_numbers<[1], [0], [0], [1], [0, 0, 1, 1], [], []>} : vector<128x48xf32>, vector<48x32xf32>, vector<128x32xf32> -> vector<128x32xf32>
    %31 = tpu.transpose %30, [1, 0] : vector<128x32xf32> -> vector<32x128xf32>
    %c2_28 = arith.constant 2 : index
    %c0_29 = arith.constant 0 : index
    %c0_30 = arith.constant 0 : index
    %32 = vector.load %arg3[%c2_28, %c0_29, %c0_30] : memref<3x32x1xf32, #tpu.memory_space<vmem>>, vector<1x32x1xf32>
    %33 = vector.shape_cast %32 : vector<1x32x1xf32> to vector<32x1xf32>
    %34 = vector.broadcast %33 : vector<32x1xf32> to vector<32x128xf32>
    %35 = arith.addf %31, %34 : vector<32x128xf32>
    %cst_31 = arith.constant 0.000000e+00 : f32
    %36 = vector.broadcast %cst_31 : f32 to vector<32x128xf32>
    %37 = arith.maximumf %35, %36 : vector<32x128xf32>
    %c64 = arith.constant 64 : index
    %c0_32 = arith.constant 0 : index
    %38 = vector.load %arg7[%c64, %c0_32] : memref<192x128xf32, #tpu.memory_space<vmem>>, vector<32x128xf32>
    tpu.vector_store %arg7[%c64, %c0_32], %37 {strides = array<i32>} : memref<192x128xf32, #tpu.memory_space<vmem>>, vector<32x128xf32>,
    %39 = arith.mulf %11, %24 : vector<32x128xf32>
    %c96 = arith.constant 96 : index
    %c0_33 = arith.constant 0 : index
    %40 = vector.load %arg7[%c96, %c0_33] : memref<192x128xf32, #tpu.memory_space<vmem>>, vector<32x128xf32>
    tpu.vector_store %arg7[%c96, %c0_33], %39 {strides = array<i32>} : memref<192x128xf32, #tpu.memory_space<vmem>>, vector<32x128xf32>,
    %41 = arith.mulf %11, %37 : vector<32x128xf32>
    %c128 = arith.constant 128 : index
    %c0_34 = arith.constant 0 : index
    %42 = vector.load %arg7[%c128, %c0_34] : memref<192x128xf32, #tpu.memory_space<vmem>>, vector<32x128xf32>
    tpu.vector_store %arg7[%c128, %c0_34], %41 {strides = array<i32>} : memref<192x128xf32, #tpu.memory_space<vmem>>, vector<32x128xf32>,
    %43 = arith.mulf %24, %37 : vector<32x128xf32>
    %c160 = arith.constant 160 : index
    %c0_35 = arith.constant 0 : index
    %44 = vector.load %arg7[%c160, %c0_35] : memref<192x128xf32, #tpu.memory_space<vmem>>, vector<32x128xf32>
    tpu.vector_store %arg7[%c160, %c0_35], %43 {strides = array<i32>} : memref<192x128xf32, #tpu.memory_space<vmem>>, vector<32x128xf32>,
    %c0_36 = arith.constant 0 : index
    %c0_37 = arith.constant 0 : index
    %45 = vector.load %arg4[%c0_36, %c0_37] : memref<192x192xf32, #tpu.memory_space<vmem>>, vector<192x192xf32>
    %c0_38 = arith.constant 0 : index
    %c0_39 = arith.constant 0 : index
    %46 = vector.load %arg7[%c0_38, %c0_39] : memref<192x128xf32, #tpu.memory_space<vmem>>, vector<192x128xf32>
    %cst_40 = arith.constant dense<0.000000e+00> : vector<192x128xf32>
    %47 = tpu.matmul %45, %46, %cst_40 {dimension_numbers = #tpu.dot_dimension_numbers<[1], [0], [0], [1], [0, 0, 1, 1], [], []>} : vector<192x192xf32>, vector<192x128xf32>, vector<192x128xf32> -> vector<192x128xf32>
    %c0_41 = arith.constant 0 : index
    %c0_42 = arith.constant 0 : index
    %48 = vector.load %arg5[%c0_41, %c0_42] : memref<192x1xf32, #tpu.memory_space<vmem>>, vector<192x1xf32>
    %49 = vector.broadcast %48 : vector<192x1xf32> to vector<192x128xf32>
    %50 = arith.addf %47, %49 : vector<192x128xf32>
    %51 = arith.negf %50 : vector<192x128xf32>
    %52 = math.exp %51 : vector<192x128xf32>
    %cst_43 = arith.constant 1.000000e+00 : f32
    %53 = vector.broadcast %cst_43 : f32 to vector<192x128xf32>
    %54 = arith.addf %53, %52 : vector<192x128xf32>
    %55 = arith.divf %53, %54 : vector<192x128xf32>
    %56 = vector.extract_strided_slice %55 {offsets = [0, 0], sizes = [32, 128], strides = [1, 1]} : vector<192x128xf32> to vector<32x128xf32>
    %57 = vector.extract_strided_slice %55 {offsets = [32, 0], sizes = [32, 128], strides = [1, 1]} : vector<192x128xf32> to vector<32x128xf32>
    %58 = vector.extract_strided_slice %55 {offsets = [64, 0], sizes = [32, 128], strides = [1, 1]} : vector<192x128xf32> to vector<32x128xf32>
    %59 = vector.extract_strided_slice %55 {offsets = [96, 0], sizes = [32, 128], strides = [1, 1]} : vector<192x128xf32> to vector<32x128xf32>
    %60 = vector.extract_strided_slice %55 {offsets = [128, 0], sizes = [32, 128], strides = [1, 1]} : vector<192x128xf32> to vector<32x128xf32>
    %61 = vector.extract_strided_slice %55 {offsets = [160, 0], sizes = [32, 128], strides = [1, 1]} : vector<192x128xf32> to vector<32x128xf32>
    %62 = arith.addf %11, %24 : vector<32x128xf32>
    %63 = arith.addf %62, %37 : vector<32x128xf32>
    %64 = arith.subf %11, %24 : vector<32x128xf32>
    %65 = arith.subf %11, %37 : vector<32x128xf32>
    %66 = arith.subf %24, %37 : vector<32x128xf32>
    %67 = arith.subf %63, %11 : vector<32x128xf32>
    %68 = arith.mulf %56, %64 : vector<32x128xf32>
    %69 = arith.addf %67, %68 : vector<32x128xf32>
    %70 = arith.mulf %57, %65 : vector<32x128xf32>
    %71 = arith.addf %69, %70 : vector<32x128xf32>
    %72 = arith.subf %63, %24 : vector<32x128xf32>
    %73 = arith.mulf %58, %64 : vector<32x128xf32>
    %74 = arith.subf %72, %73 : vector<32x128xf32>
    %75 = arith.mulf %59, %66 : vector<32x128xf32>
    %76 = arith.addf %74, %75 : vector<32x128xf32>
    %77 = arith.subf %63, %37 : vector<32x128xf32>
    %78 = arith.mulf %60, %65 : vector<32x128xf32>
    %79 = arith.subf %77, %78 : vector<32x128xf32>
    %80 = arith.mulf %61, %66 : vector<32x128xf32>
    %81 = arith.subf %79, %80 : vector<32x128xf32>
    %82 = tpu.transpose %71, [1, 0] : vector<32x128xf32> -> vector<128x32xf32>
    %c0_44 = arith.constant 0 : index
    %c0_45 = arith.constant 0 : index
    %c0_46 = arith.constant 0 : index
    %83 = vector.load %arg6[%c0_44, %c0_45, %c0_46] : memref<3x128x32xf32, #tpu.memory_space<vmem>>, vector<1x128x32xf32>
    %84 = vector.shape_cast %83 : vector<1x128x32xf32> to vector<128x32xf32>
    %85 = vector.shape_cast %82 : vector<128x32xf32> to vector<1x128x32xf32>
    tpu.vector_store %arg6[%c0_44, %c0_45, %c0_46], %85 {strides = array<i32>} : memref<3x128x32xf32, #tpu.memory_space<vmem>>, vector<1x128x32xf32>,
    %86 = tpu.transpose %76, [1, 0] : vector<32x128xf32> -> vector<128x32xf32>
    %c1_47 = arith.constant 1 : index
    %c0_48 = arith.constant 0 : index
    %c0_49 = arith.constant 0 : index
    %87 = vector.load %arg6[%c1_47, %c0_48, %c0_49] : memref<3x128x32xf32, #tpu.memory_space<vmem>>, vector<1x128x32xf32>
    %88 = vector.shape_cast %87 : vector<1x128x32xf32> to vector<128x32xf32>
    %89 = vector.shape_cast %86 : vector<128x32xf32> to vector<1x128x32xf32>
    tpu.vector_store %arg6[%c1_47, %c0_48, %c0_49], %89 {strides = array<i32>} : memref<3x128x32xf32, #tpu.memory_space<vmem>>, vector<1x128x32xf32>,
    %90 = tpu.transpose %81, [1, 0] : vector<32x128xf32> -> vector<128x32xf32>
    %c2_50 = arith.constant 2 : index
    %c0_51 = arith.constant 0 : index
    %c0_52 = arith.constant 0 : index
    %91 = vector.load %arg6[%c2_50, %c0_51, %c0_52] : memref<3x128x32xf32, #tpu.memory_space<vmem>>, vector<1x128x32xf32>
    %92 = vector.shape_cast %91 : vector<1x128x32xf32> to vector<128x32xf32>
    %93 = vector.shape_cast %90 : vector<128x32xf32> to vector<1x128x32xf32>
    tpu.vector_store %arg6[%c2_50, %c0_51, %c0_52], %93 {strides = array<i32>} : memref<3x128x32xf32, #tpu.memory_space<vmem>>, vector<1x128x32xf32>,
    return
  }
  func.func @transform_0(%arg0: i32) -> (i32, i32, i32) {
    %c0_i32 = arith.constant 0 : i32
    %c0_i32_0 = arith.constant 0 : i32
    %c0_i32_1 = arith.constant 0 : i32
    return %c0_i32, %arg0, %c0_i32_0 : i32, i32, i32
  }
  func.func @transform_1(%arg0: i32) -> (i32, i32, i32) {
    %c0_i32 = arith.constant 0 : i32
    %c0_i32_0 = arith.constant 0 : i32
    %c0_i32_1 = arith.constant 0 : i32
    %c0_i32_2 = arith.constant 0 : i32
    return %c0_i32, %c0_i32_0, %c0_i32_1 : i32, i32, i32
  }
  func.func @transform_2(%arg0: i32) -> (i32, i32, i32) {
    %c0_i32 = arith.constant 0 : i32
    %c0_i32_0 = arith.constant 0 : i32
    %c0_i32_1 = arith.constant 0 : i32
    %c0_i32_2 = arith.constant 0 : i32
    return %c0_i32, %c0_i32_0, %c0_i32_1 : i32, i32, i32
  }
  func.func @transform_3(%arg0: i32) -> (i32, i32) {
    %c0_i32 = arith.constant 0 : i32
    %c0_i32_0 = arith.constant 0 : i32
    %c0_i32_1 = arith.constant 0 : i32
    return %c0_i32, %c0_i32_0 : i32, i32
  }
  func.func @transform_4(%arg0: i32) -> (i32, i32) {
    %c0_i32 = arith.constant 0 : i32
    %c0_i32_0 = arith.constant 0 : i32
    %c0_i32_1 = arith.constant 0 : i32
    return %c0_i32, %c0_i32_0 : i32, i32
  }
  func.func @transform_5(%arg0: i32) -> (i32, i32, i32) {
    %c0_i32 = arith.constant 0 : i32
    %c0_i32_0 = arith.constant 0 : i32
    %c0_i32_1 = arith.constant 0 : i32
    return %c0_i32, %arg0, %c0_i32_0 : i32, i32, i32
  }
}

</mosaic_0001>

<llo_original>
// kernel: tpu_custom_call.1
$region0: #{tpu_custom_call.1}
  #allocation0 [shape = 'u32[]', space=smem, size = 0x4, offset = 0x4, fixed_abs, tag = 'smem constant byte address 0x4 - core index']
  #allocation1 [shape = 'u32[144,128]{1,0:T(1,128)}', space=vmem, size = 0x12000, scoped, tag = 'internal scratch']
  #allocation2 [shape = 'f32[192,128]{1,0:T(8,128)}', space=vmem, size = 0x18000, scoped, tag = 'scratch operand']
  %s0 = inlined_call_operand.vmem [shape: f32[3,128,48], index: 0, kind: input, shape index: {}]
  %s1 = inlined_call_operand.vmem [shape: f32[3,48,32], index: 1, kind: input, shape index: {}]
  %s2 = inlined_call_operand.vmem [shape: f32[3,32,1], index: 2, kind: input, shape index: {}]
  %s3 = inlined_call_operand.vmem [shape: f32[192,192], index: 3, kind: input, shape index: {}]
  %s4 = inlined_call_operand.vmem [shape: f32[192,1], index: 4, kind: input, shape index: {}]
  %s5 = inlined_call_operand.vmem [shape: f32[3,128,32], index: 5, kind: output, shape index: {}]
  %s6 = sld [smem:[#allocation0]]
  $region30: #{tpu_custom_call.1} parent=0
    _
  %s8 = ssub.s32 1, %s6
  %s9 = scalar_select 0, %s8, %s6
  // Predicated region
  $region2: #{tpu_custom_call.1} parent=0 // pred_check
    _
  $region3: #{tpu_custom_call.1} parent=0 // pred_check_branch
    %11 = sbr.rel (0) target = $region5
  $region4: #{tpu_custom_call.1} parent=0 // pred_region
    _
  $region5: #{tpu_custom_call.1} parent=0 // pred_fallthru
    _
  // Predicated region
  $region6: #{tpu_custom_call.1} parent=0 // pred_check
    _
  $region7: #{tpu_custom_call.1} parent=0 // pred_check_branch
    %13 = sbr.rel (0) target = $region9
  $region8: #{tpu_custom_call.1} parent=0 // pred_region
    _
  $region9: #{tpu_custom_call.1} parent=0 // pred_fallthru
    _
  // Predicated region
  $region10: #{tpu_custom_call.1} parent=0 // pred_check
    _
  $region11: #{tpu_custom_call.1} parent=0 // pred_check_branch
    %15 = sbr.rel (0) target = $region13
  $region12: #{tpu_custom_call.1} parent=0 // pred_region
    _
  $region13: #{tpu_custom_call.1} parent=0 // pred_fallthru
    _
  // Predicated region
  $region14: #{tpu_custom_call.1} parent=0 // pred_check
    _
  $region15: #{tpu_custom_call.1} parent=0 // pred_check_branch
    %17 = sbr.rel (0) target = $region17
  $region16: #{tpu_custom_call.1} parent=0 // pred_region
    _
  $region17: #{tpu_custom_call.1} parent=0 // pred_fallthru
    _
  // Predicated region
  $region18: #{tpu_custom_call.1} parent=0 // pred_check
    _
  $region19: #{tpu_custom_call.1} parent=0 // pred_check_branch
    %19 = sbr.rel (0) target = $region21
  $region20: #{tpu_custom_call.1} parent=0 // pred_region
    _
  $region21: #{tpu_custom_call.1} parent=0 // pred_fallthru
    _
  %v20 = vld [vmem:[%s0] sm:$0xff]
  %v21 = vld [vmem:[%s0 + $0x8] sm:$0xff]
  %v22 = vld [vmem:[%s0 + $0x10] sm:$0xff]
  %v23 = vld [vmem:[%s0 + $0x18] sm:$0xff]
  %v24 = vld [vmem:[%s0 + $0x20] sm:$0xff]
  %v25 = vld [vmem:[%s0 + $0x28] sm:$0xff]
  %v26 = vld [vmem:[%s0 + $0x30] sm:$0xff]
  %v27 = vld [vmem:[%s0 + $0x38] sm:$0xff]
  %v28 = vld [vmem:[%s0 + $0x40] sm:$0xff]
  %v29 = vld [vmem:[%s0 + $0x48] sm:$0xff]
  %v30 = vld [vmem:[%s0 + $0x50] sm:$0xff]
  %v31 = vld [vmem:[%s0 + $0x58] sm:$0xff]
  %v32 = vld [vmem:[%s0 + $0x60] sm:$0xff]
  %v33 = vld [vmem:[%s0 + $0x68] sm:$0xff]
  %v34 = vld [vmem:[%s0 + $0x70] sm:$0xff]
  %v35 = vld [vmem:[%s0 + $0x78] sm:$0xff]
  %v36 = vld [vmem:[%s1] sm:$0xff]
  %v37 = vld [vmem:[%s1 + $0x8] sm:$0xff]
  %v38 = vld [vmem:[%s1 + $0x10] sm:$0xff]
  %v39 = vld [vmem:[%s1 + $0x18] sm:$0xff]
  %v40 = vld [vmem:[%s1 + $0x20] sm:$0xff]
  %v41 = vld [vmem:[%s1 + $0x28] sm:$0xff]
  %vm42 = vcmask 392192
  %v44 = vsel %vm42, %v20, 0
  %v47 = vsel %vm42, %v21, 0
  %v50 = vsel %vm42, %v22, 0
  %v53 = vsel %vm42, %v23, 0
  %v56 = vsel %vm42, %v24, 0
  %v59 = vsel %vm42, %v25, 0
  %v62 = vsel %vm42, %v26, 0
  %v65 = vsel %vm42, %v27, 0
  %v68 = vsel %vm42, %v28, 0
  %v71 = vsel %vm42, %v29, 0
  %v74 = vsel %vm42, %v30, 0
  %v77 = vsel %vm42, %v31, 0
  %v80 = vsel %vm42, %v32, 0
  %v83 = vsel %vm42, %v33, 0
  %v86 = vsel %vm42, %v34, 0
  %v89 = vsel %vm42, %v35, 0
  %91 = vmatprep.subr.mxu0 0.0
  %92 = vmatpush1.msra.mxu0 0.0
  %93 = vmatprep.subr.mxu0 0.0
  %94 = vmatpush1.msra.mxu0 0.0
  %95 = vmatprep.subr.mxu0 0.0
  %96 = vmatpush1.msra.mxu0 0.0
  %97 = vmatprep.subr.mxu0 0.0
  %98 = vmatpush1.msra.mxu0 0.0
  %99 = vmatprep.subr.mxu0 0.0
  %100 = vmatpush1.msra.mxu0 0.0
  %101 = vmatprep.subr.mxu0 0.0
  %102 = vmatpush1.msra.mxu0 0.0
  %103 = vmatprep.subr.mxu0 0.0
  %104 = vmatpush1.msra.mxu0 0.0
  %105 = vmatprep.subr.mxu0 0.0
  %106 = vmatpush1.msra.mxu0 0.0
  %107 = vmatprep.subr.mxu0 0.0
  %108 = vmatpush1.msra.mxu0 0.0
  %109 = vmatprep.subr.mxu0 0.0
  %110 = vmatpush1.msra.mxu0 0.0
  %111 = vmatprep.subr.mxu0 0.0
  %112 = vmatpush1.msra.mxu0 %v41
  %113 = vmatprep.subr.mxu0 0.0
  %114 = vmatpush1.msra.mxu0 %v40
  %115 = vmatprep.subr.mxu0 0.0
  %116 = vmatpush1.msra.mxu0 %v39
  %117 = vmatprep.subr.mxu0 0.0
  %118 = vmatpush1.msra.mxu0 %v38
  %119 = vmatprep.subr.mxu0 0.0
  %120 = vmatpush1.msra.mxu0 %v37
  %121 = vmatprep.subr.mxu0 0.0
  %122 = vmatpush1.msra.mxu0 %v36
  %123 = vmatprep.subr.mxu0 0.0
  %124 = vmatpush2.msra.mxu0 0.0
  %125 = vmatprep.subr.mxu0 0.0
  %126 = vmatpush2.msra.mxu0 0.0
  %127 = vmatprep.subr.mxu0 0.0
  %128 = vmatpush2.msra.mxu0 0.0
  %129 = vmatprep.subr.mxu0 0.0
  %130 = vmatpush2.msra.mxu0 0.0
  %131 = vmatprep.subr.mxu0 0.0
  %132 = vmatpush2.msra.mxu0 0.0
  %133 = vmatprep.subr.mxu0 0.0
  %134 = vmatpush2.msra.mxu0 0.0
  %135 = vmatprep.subr.mxu0 0.0
  %136 = vmatpush2.msra.mxu0 0.0
  %137 = vmatprep.subr.mxu0 0.0
  %138 = vmatpush2.msra.mxu0 0.0
  %139 = vmatprep.subr.mxu0 0.0
  %140 = vmatpush2.msra.mxu0 0.0
  %141 = vmatprep.subr.mxu0 0.0
  %142 = vmatpush2.msra.mxu0 0.0
  %143 = vmatprep.subr.mxu0 0.0
  %144 = vmatpush2.msra.mxu0 0.0
  %145 = vmatprep.subr.mxu0 0.0
  %146 = vmatpush2.msra.mxu0 0.0
  %147 = vmatprep.subr.mxu0 0.0
  %148 = vmatpush2.msra.mxu0 0.0
  %149 = vmatprep.subr.mxu0 0.0
  %150 = vmatpush2.msra.mxu0 0.0
  %151 = vmatprep.subr.mxu0 0.0
  %152 = vmatpush2.msra.mxu0 0.0
  %153 = vmatprep.subr.mxu0 0.0
  %154 = vmatpush2.msra.mxu0 0.0
  %155 = vmatprep.mubr.f32.mxu0 0.0
  %156 = vmatmul.mubr.f32.gmra.mxu0 %v44
  %v157 = vpop.f32.mrf.mxu0
  %v158 = vadd.f32 0.0, %v157
  %v159 = vpop.f32.mrf.mxu0
  %160 = vmatprep.mubr.f32.mxu0 0.0
  %161 = vmatmul.mubr.f32.gmra.mxu0 %v47
  %v162 = vpop.f32.mrf.mxu0
  %v163 = vadd.f32 0.0, %v162
  %v164 = vpop.f32.mrf.mxu0
  %165 = vmatprep.mubr.f32.mxu0 0.0
  %166 = vmatmul.mubr.f32.gmra.mxu0 %v50
  %v167 = vpop.f32.mrf.mxu0
  %v168 = vadd.f32 0.0, %v167
  %v169 = vpop.f32.mrf.mxu0
  %170 = vmatprep.mubr.f32.mxu0 0.0
  %171 = vmatmul.mubr.f32.gmra.mxu0 %v53
  %v172 = vpop.f32.mrf.mxu0
  %v173 = vadd.f32 0.0, %v172
  %v174 = vpop.f32.mrf.mxu0
  %175 = vmatprep.mubr.f32.mxu0 0.0
  %176 = vmatmul.mubr.f32.gmra.mxu0 %v56
  %v177 = vpop.f32.mrf.mxu0
  %v178 = vadd.f32 0.0, %v177
  %v179 = vpop.f32.mrf.mxu0
  %180 = vmatprep.mubr.f32.mxu0 0.0
  %181 = vmatmul.mubr.f32.gmra.mxu0 %v59
  %v182 = vpop.f32.mrf.mxu0
  %v183 = vadd.f32 0.0, %v182
  %v184 = vpop.f32.mrf.mxu0
  %185 = vmatprep.mubr.f32.mxu0 0.0
  %186 = vmatmul.mubr.f32.gmra.mxu0 %v62
  %v187 = vpop.f32.mrf.mxu0
  %v188 = vadd.f32 0.0, %v187
  %v189 = vpop.f32.mrf.mxu0
  %190 = vmatprep.mubr.f32.mxu0 0.0
  %191 = vmatmul.mubr.f32.gmra.mxu0 %v65
  %v192 = vpop.f32.mrf.mxu0
  %v193 = vadd.f32 0.0, %v192
  %v194 = vpop.f32.mrf.mxu0
  %195 = vmatprep.mubr.f32.mxu0 0.0
  %196 = vmatmul.mubr.f32.gmra.mxu0 %v68
  %v197 = vpop.f32.mrf.mxu0
  %v198 = vadd.f32 0.0, %v197
  %v199 = vpop.f32.mrf.mxu0
  %200 = vmatprep.mubr.f32.mxu0 0.0
  %201 = vmatmul.mubr.f32.gmra.mxu0 %v71
  %v202 = vpop.f32.mrf.mxu0
  %v203 = vadd.f32 0.0, %v202
  %v204 = vpop.f32.mrf.mxu0
  %205 = vmatprep.mubr.f32.mxu0 0.0
  %206 = vmatmul.mubr.f32.gmra.mxu0 %v74
  %v207 = vpop.f32.mrf.mxu0
  %v208 = vadd.f32 0.0, %v207
  %v209 = vpop.f32.mrf.mxu0
  %210 = vmatprep.mubr.f32.mxu0 0.0
  %211 = vmatmul.mubr.f32.gmra.mxu0 %v77
  %v212 = vpop.f32.mrf.mxu0
  %v213 = vadd.f32 0.0, %v212
  %v214 = vpop.f32.mrf.mxu0
  %215 = vmatprep.mubr.f32.mxu0 0.0
  %216 = vmatmul.mubr.f32.gmra.mxu0 %v80
  %v217 = vpop.f32.mrf.mxu0
  %v218 = vadd.f32 0.0, %v217
  %v219 = vpop.f32.mrf.mxu0
  %220 = vmatprep.mubr.f32.mxu0 0.0
  %221 = vmatmul.mubr.f32.gmra.mxu0 %v83
  %v222 = vpop.f32.mrf.mxu0
  %v223 = vadd.f32 0.0, %v222
  %v224 = vpop.f32.mrf.mxu0
  %225 = vmatprep.mubr.f32.mxu0 0.0
  %226 = vmatmul.mubr.f32.gmra.mxu0 %v86
  %v227 = vpop.f32.mrf.mxu0
  %v228 = vadd.f32 0.0, %v227
  %v229 = vpop.f32.mrf.mxu0
  %230 = vmatprep.mubr.f32.mxu0 0.0
  %231 = vmatmul.mubr.f32.gmra.mxu0 %v89
  %v232 = vpop.f32.mrf.mxu0
  %v233 = vadd.f32 0.0, %v232
  %v234 = vpop.f32.mrf.mxu0
  %235 = vdwg.mxu0
  %236 = vxpose.xlu0.b32.start [1/16] %v158, 128
  %237 = vxpose.xlu0.b32.cont [2/16] %v163, 128
  %238 = vxpose.xlu0.b32.cont [3/16] %v168, 128
  %239 = vxpose.xlu0.b32.cont [4/16] %v173, 128
  %240 = vxpose.xlu0.b32.cont [5/16] %v178, 128
  %241 = vxpose.xlu0.b32.cont [6/16] %v183, 128
  %242 = vxpose.xlu0.b32.cont [7/16] %v188, 128
  %243 = vxpose.xlu0.b32.cont [8/16] %v193, 128
  %244 = vxpose.xlu0.b32.cont [9/16] %v198, 128
  %245 = vxpose.xlu0.b32.cont [10/16] %v203, 128
  %246 = vxpose.xlu0.b32.cont [11/16] %v208, 128
  %247 = vxpose.xlu0.b32.cont [12/16] %v213, 128
  %248 = vxpose.xlu0.b32.cont [13/16] %v218, 128
  %249 = vxpose.xlu0.b32.cont [14/16] %v223, 128
  %250 = vxpose.xlu0.b32.cont [15/16] %v228, 128
  %251 = vxpose.xlu0.b32.end [16/16] %v233, 128
  %v252 = vpop.trf.xlu0
  %v253 = vpop.trf.xlu0
  %v254 = vpop.trf.xlu0
  %v255 = vpop.trf.xlu0
  %v256 = vpop.trf.xlu0
  %v257 = vpop.trf.xlu0
  %v258 = vpop.trf.xlu0
  %v259 = vpop.trf.xlu0
  %v260 = vpop.trf.xlu0
  %v261 = vpop.trf.xlu0
  %v262 = vpop.trf.xlu0
  %v263 = vpop.trf.xlu0
  %v264 = vpop.trf.xlu0
  %v265 = vpop.trf.xlu0
  %v266 = vpop.trf.xlu0
  %v267 = vpop.trf.xlu0
  %v268 = vld [vmem:[%s2] sm:$0xff]
  %v269 = vld [vmem:[%s2 + $0x8] sm:$0xff]
  %v270 = vld [vmem:[%s2 + $0x10] sm:$0xff]
  %v271 = vld [vmem:[%s2 + $0x18] sm:$0xff]
  %273 = vset.pattern.permute.xlu0 0
  %274 = vperm.xlu0 %273, %v268
  %v275 = vpop.permute.xlu0 %274
  %278 = vset.pattern.permute.xlu0 0
  %279 = vperm.xlu0 %278, %v269
  %v280 = vpop.permute.xlu0 %279
  %283 = vset.pattern.permute.xlu0 0
  %284 = vperm.xlu0 %283, %v270
  %v285 = vpop.permute.xlu0 %284
  %288 = vset.pattern.permute.xlu0 0
  %289 = vperm.xlu0 %288, %v271
  %v290 = vpop.permute.xlu0 %289
  %v292 = vadd.f32 %v252, %v275
  %v293 = vadd.f32 %v253, %v280
  %v294 = vadd.f32 %v254, %v285
  %v295 = vadd.f32 %v255, %v290
  %v296 = vmax.f32 %v292, 0.0
  %v297 = vmax.f32 %v293, 0.0
  %v298 = vmax.f32 %v294, 0.0
  %v299 = vmax.f32 %v295, 0.0
  %300 = vst [vmem:[#allocation2] sm:$0xff] %v296
  %301 = vst [vmem:[#allocation2 + $0x8] sm:$0xff] %v297
  %302 = vst [vmem:[#allocation2 + $0x10] sm:$0xff] %v298
  %303 = vst [vmem:[#allocation2 + $0x18] sm:$0xff] %v299
  %s304 = scalar_lea.vmem %s0, 128
  %v305 = vld [vmem:[%s304] sm:$0xff]
  %v306 = vld [vmem:[%s304 + $0x8] sm:$0xff]
  %v307 = vld [vmem:[%s304 + $0x10] sm:$0xff]
  %v308 = vld [vmem:[%s304 + $0x18] sm:$0xff]
  %v309 = vld [vmem:[%s304 + $0x20] sm:$0xff]
  %v310 = vld [vmem:[%s304 + $0x28] sm:$0xff]
  %v311 = vld [vmem:[%s304 + $0x30] sm:$0xff]
  %v312 = vld [vmem:[%s304 + $0x38] sm:$0xff]
  %v313 = vld [vmem:[%s304 + $0x40] sm:$0xff]
  %v314 = vld [vmem:[%s304 + $0x48] sm:$0xff]
  %v315 = vld [vmem:[%s304 + $0x50] sm:$0xff]
  %v316 = vld [vmem:[%s304 + $0x58] sm:$0xff]
  %v317 = vld [vmem:[%s304 + $0x60] sm:$0xff]
  %v318 = vld [vmem:[%s304 + $0x68] sm:$0xff]
  %v319 = vld [vmem:[%s304 + $0x70] sm:$0xff]
  %v320 = vld [vmem:[%s304 + $0x78] sm:$0xff]
  %s321 = scalar_lea.vmem %s1, 48
  %v322 = vld [vmem:[%s321] sm:$0xff]
  %v323 = vld [vmem:[%s321 + $0x8] sm:$0xff]
  %v324 = vld [vmem:[%s321 + $0x10] sm:$0xff]
  %v325 = vld [vmem:[%s321 + $0x18] sm:$0xff]
  %v326 = vld [vmem:[%s321 + $0x20] sm:$0xff]
  %v327 = vld [vmem:[%s321 + $0x28] sm:$0xff]
  %v329 = vsel %vm42, %v305, 0
  %v332 = vsel %vm42, %v306, 0
  %v335 = vsel %vm42, %v307, 0
  %v338 = vsel %vm42, %v308, 0
  %v341 = vsel %vm42, %v309, 0
  %v344 = vsel %vm42, %v310, 0
  %v347 = vsel %vm42, %v311, 0
  %v350 = vsel %vm42, %v312, 0
  %v353 = vsel %vm42, %v313, 0
  %v356 = vsel %vm42, %v314, 0
  %v359 = vsel %vm42, %v315, 0
  %v362 = vsel %vm42, %v316, 0
  %v365 = vsel %vm42, %v317, 0
  %v368 = vsel %vm42, %v318, 0
  %v371 = vsel %vm42, %v319, 0
  %v374 = vsel %vm42, %v320, 0
  %376 = vmatprep.subr.mxu0 0.0
  %377 = vmatpush1.msra.mxu0 0.0
  %378 = vmatprep.subr.mxu0 0.0
  %379 = vmatpush1.msra.mxu0 0.0
  %380 = vmatprep.subr.mxu0 0.0
  %381 = vmatpush1.msra.mxu0 0.0
  %382 = vmatprep.subr.mxu0 0.0
  %383 = vmatpush1.msra.mxu0 0.0
  %384 = vmatprep.subr.mxu0 0.0
  %385 = vmatpush1.msra.mxu0 0.0
  %386 = vmatprep.subr.mxu0 0.0
  %387 = vmatpush1.msra.mxu0 0.0
  %388 = vmatprep.subr.mxu0 0.0
  %389 = vmatpush1.msra.mxu0 0.0
  %390 = vmatprep.subr.mxu0 0.0
  %391 = vmatpush1.msra.mxu0 0.0
  %392 = vmatprep.subr.mxu0 0.0
  %393 = vmatpush1.msra.mxu0 0.0
  %394 = vmatprep.subr.mxu0 0.0
  %395 = vmatpush1.msra.mxu0 0.0
  %396 = vmatprep.subr.mxu0 0.0
  %397 = vmatpush1.msra.mxu0 %v327
  %398 = vmatprep.subr.mxu0 0.0
  %399 = vmatpush1.msra.mxu0 %v326
  %400 = vmatprep.subr.mxu0 0.0
  %401 = vmatpush1.msra.mxu0 %v325
  %402 = vmatprep.subr.mxu0 0.0
  %403 = vmatpush1.msra.mxu0 %v324
  %404 = vmatprep.subr.mxu0 0.0
  %405 = vmatpush1.msra.mxu0 %v323
  %406 = vmatprep.subr.mxu0 0.0
  %407 = vmatpush1.msra.mxu0 %v322
  %408 = vmatprep.subr.mxu0 0.0
  %409 = vmatpush2.msra.mxu0 0.0
  %410 = vmatprep.subr.mxu0 0.0
  %411 = vmatpush2.msra.mxu0 0.0
  %412 = vmatprep.subr.mxu0 0.0
  %413 = vmatpush2.msra.mxu0 0.0
  %414 = vmatprep.subr.mxu0 0.0
  %415 = vmatpush2.msra.mxu0 0.0
  %416 = vmatprep.subr.mxu0 0.0
  %417 = vmatpush2.msra.mxu0 0.0
  %418 = vmatprep.subr.mxu0 0.0
  %419 = vmatpush2.msra.mxu0 0.0
  %420 = vmatprep.subr.mxu0 0.0
  %421 = vmatpush2.msra.mxu0 0.0
  %422 = vmatprep.subr.mxu0 0.0
  %423 = vmatpush2.msra.mxu0 0.0
  %424 = vmatprep.subr.mxu0 0.0
  %425 = vmatpush2.msra.mxu0 0.0
  %426 = vmatprep.subr.mxu0 0.0
  %427 = vmatpush2.msra.mxu0 0.0
  %428 = vmatprep.subr.mxu0 0.0
  %429 = vmatpush2.msra.mxu0 0.0
  %430 = vmatprep.subr.mxu0 0.0
  %431 = vmatpush2.msra.mxu0 0.0
  %432 = vmatprep.subr.mxu0 0.0
  %433 = vmatpush2.msra.mxu0 0.0
  %434 = vmatprep.subr.mxu0 0.0
  %435 = vmatpush2.msra.mxu0 0.0
  %436 = vmatprep.subr.mxu0 0.0
  %437 = vmatpush2.msra.mxu0 0.0
  %438 = vmatprep.subr.mxu0 0.0
  %439 = vmatpush2.msra.mxu0 0.0
  %440 = vmatprep.mubr.f32.mxu0 0.0
  %441 = vmatmul.mubr.f32.gmra.mxu0 %v329
  %v442 = vpop.f32.mrf.mxu0
  %v443 = vadd.f32 0.0, %v442
  %v444 = vpop.f32.mrf.mxu0
  %445 = vmatprep.mubr.f32.mxu0 0.0
  %446 = vmatmul.mubr.f32.gmra.mxu0 %v332
  %v447 = vpop.f32.mrf.mxu0
  %v448 = vadd.f32 0.0, %v447
  %v449 = vpop.f32.mrf.mxu0
  %450 = vmatprep.mubr.f32.mxu0 0.0
  %451 = vmatmul.mubr.f32.gmra.mxu0 %v335
  %v452 = vpop.f32.mrf.mxu0
  %v453 = vadd.f32 0.0, %v452
  %v454 = vpop.f32.mrf.mxu0
  %455 = vmatprep.mubr.f32.mxu0 0.0
  %456 = vmatmul.mubr.f32.gmra.mxu0 %v338
  %v457 = vpop.f32.mrf.mxu0
  %v458 = vadd.f32 0.0, %v457
  %v459 = vpop.f32.mrf.mxu0
  %460 = vmatprep.mubr.f32.mxu0 0.0
  %461 = vmatmul.mubr.f32.gmra.mxu0 %v341
  %v462 = vpop.f32.mrf.mxu0
  %v463 = vadd.f32 0.0, %v462
  %v464 = vpop.f32.mrf.mxu0
  %465 = vmatprep.mubr.f32.mxu0 0.0
  %466 = vmatmul.mubr.f32.gmra.mxu0 %v344
  %v467 = vpop.f32.mrf.mxu0
  %v468 = vadd.f32 0.0, %v467
  %v469 = vpop.f32.mrf.mxu0
  %470 = vmatprep.mubr.f32.mxu0 0.0
  %471 = vmatmul.mubr.f32.gmra.mxu0 %v347
  %v472 = vpop.f32.mrf.mxu0
  %v473 = vadd.f32 0.0, %v472
  %v474 = vpop.f32.mrf.mxu0
  %475 = vmatprep.mubr.f32.mxu0 0.0
  %476 = vmatmul.mubr.f32.gmra.mxu0 %v350
  %v477 = vpop.f32.mrf.mxu0
  %v478 = vadd.f32 0.0, %v477
  %v479 = vpop.f32.mrf.mxu0
  %480 = vmatprep.mubr.f32.mxu0 0.0
  %481 = vmatmul.mubr.f32.gmra.mxu0 %v353
  %v482 = vpop.f32.mrf.mxu0
  %v483 = vadd.f32 0.0, %v482
  %v484 = vpop.f32.mrf.mxu0
  %485 = vmatprep.mubr.f32.mxu0 0.0
  %486 = vmatmul.mubr.f32.gmra.mxu0 %v356
  %v487 = vpop.f32.mrf.mxu0
  %v488 = vadd.f32 0.0, %v487
  %v489 = vpop.f32.mrf.mxu0
  %490 = vmatprep.mubr.f32.mxu0 0.0
  %491 = vmatmul.mubr.f32.gmra.mxu0 %v359
  %v492 = vpop.f32.mrf.mxu0
  %v493 = vadd.f32 0.0, %v492
  %v494 = vpop.f32.mrf.mxu0
  %495 = vmatprep.mubr.f32.mxu0 0.0
  %496 = vmatmul.mubr.f32.gmra.mxu0 %v362
  %v497 = vpop.f32.mrf.mxu0
  %v498 = vadd.f32 0.0, %v497
  %v499 = vpop.f32.mrf.mxu0
  %500 = vmatprep.mubr.f32.mxu0 0.0
  %501 = vmatmul.mubr.f32.gmra.mxu0 %v365
  %v502 = vpop.f32.mrf.mxu0
  %v503 = vadd.f32 0.0, %v502
  %v504 = vpop.f32.mrf.mxu0
  %505 = vmatprep.mubr.f32.mxu0 0.0
  %506 = vmatmul.mubr.f32.gmra.mxu0 %v368
  %v507 = vpop.f32.mrf.mxu0
  %v508 = vadd.f32 0.0, %v507
  %v509 = vpop.f32.mrf.mxu0
  %510 = vmatprep.mubr.f32.mxu0 0.0
  %511 = vmatmul.mubr.f32.gmra.mxu0 %v371
  %v512 = vpop.f32.mrf.mxu0
  %v513 = vadd.f32 0.0, %v512
  %v514 = vpop.f32.mrf.mxu0
  %515 = vmatprep.mubr.f32.mxu0 0.0
  %516 = vmatmul.mubr.f32.gmra.mxu0 %v374
  %v517 = vpop.f32.mrf.mxu0
  %v518 = vadd.f32 0.0, %v517
  %v519 = vpop.f32.mrf.mxu0
  %520 = vdwg.mxu0
  %521 = vxpose.xlu0.b32.start [1/16] %v443, 128
  %522 = vxpose.xlu0.b32.cont [2/16] %v448, 128
  %523 = vxpose.xlu0.b32.cont [3/16] %v453, 128
  %524 = vxpose.xlu0.b32.cont [4/16] %v458, 128
  %525 = vxpose.xlu0.b32.cont [5/16] %v463, 128
  %526 = vxpose.xlu0.b32.cont [6/16] %v468, 128
  %527 = vxpose.xlu0.b32.cont [7/16] %v473, 128
  %528 = vxpose.xlu0.b32.cont [8/16] %v478, 128
  %529 = vxpose.xlu0.b32.cont [9/16] %v483, 128
  %530 = vxpose.xlu0.b32.cont [10/16] %v488, 128
  %531 = vxpose.xlu0.b32.cont [11/16] %v493, 128
  %532 = vxpose.xlu0.b32.cont [12/16] %v498, 128
  %533 = vxpose.xlu0.b32.cont [13/16] %v503, 128
  %534 = vxpose.xlu0.b32.cont [14/16] %v508, 128
  %535 = vxpose.xlu0.b32.cont [15/16] %v513, 128
  %536 = vxpose.xlu0.b32.end [16/16] %v518, 128
  %v537 = vpop.trf.xlu0
  %v538 = vpop.trf.xlu0
  %v539 = vpop.trf.xlu0
  %v540 = vpop.trf.xlu0
  %v541 = vpop.trf.xlu0
  %v542 = vpop.trf.xlu0
  %v543 = vpop.trf.xlu0
  %v544 = vpop.trf.xlu0
  %v545 = vpop.trf.xlu0
  %v546 = vpop.trf.xlu0
  %v547 = vpop.trf.xlu0
  %v548 = vpop.trf.xlu0
  %v549 = vpop.trf.xlu0
  %v550 = vpop.trf.xlu0
  %v551 = vpop.trf.xlu0
  %v552 = vpop.trf.xlu0
  %s553 = scalar_lea.vmem %s2, 32
  %v554 = vld [vmem:[%s553] sm:$0xff]
  %v555 = vld [vmem:[%s553 + $0x8] sm:$0xff]
  %v556 = vld [vmem:[%s553 + $0x10] sm:$0xff]
  %v557 = vld [vmem:[%s553 + $0x18] sm:$0xff]
  %559 = vset.pattern.permute.xlu0 0
  %560 = vperm.xlu0 %559, %v554
  %v561 = vpop.permute.xlu0 %560
  %564 = vset.pattern.permute.xlu0 0
  %565 = vperm.xlu0 %564, %v555
  %v566 = vpop.permute.xlu0 %565
  %569 = vset.pattern.permute.xlu0 0
  %570 = vperm.xlu0 %569, %v556
  %v571 = vpop.permute.xlu0 %570
  %574 = vset.pattern.permute.xlu0 0
  %575 = vperm.xlu0 %574, %v557
  %v576 = vpop.permute.xlu0 %575
  %v578 = vadd.f32 %v537, %v561
  %v579 = vadd.f32 %v538, %v566
  %v580 = vadd.f32 %v539, %v571
  %v581 = vadd.f32 %v540, %v576
  %v582 = vmax.f32 %v578, 0.0
  %v583 = vmax.f32 %v579, 0.0
  %v584 = vmax.f32 %v580, 0.0
  %v585 = vmax.f32 %v581, 0.0
  %586 = vst [vmem:[#allocation2 + $0x20] sm:$0xff] %v582
  %587 = vst [vmem:[#allocation2 + $0x28] sm:$0xff] %v583
  %588 = vst [vmem:[#allocation2 + $0x30] sm:$0xff] %v584
  %589 = vst [vmem:[#allocation2 + $0x38] sm:$0xff] %v585
  %s590 = scalar_lea.vmem %s0, 256
  %v591 = vld [vmem:[%s590] sm:$0xff]
  %v592 = vld [vmem:[%s590 + $0x8] sm:$0xff]
  %v593 = vld [vmem:[%s590 + $0x10] sm:$0xff]
  %v594 = vld [vmem:[%s590 + $0x18] sm:$0xff]
  %v595 = vld [vmem:[%s590 + $0x20] sm:$0xff]
  %v596 = vld [vmem:[%s590 + $0x28] sm:$0xff]
  %v597 = vld [vmem:[%s590 + $0x30] sm:$0xff]
  %v598 = vld [vmem:[%s590 + $0x38] sm:$0xff]
  %v599 = vld [vmem:[%s590 + $0x40] sm:$0xff]
  %v600 = vld [vmem:[%s590 + $0x48] sm:$0xff]
  %v601 = vld [vmem:[%s590 + $0x50] sm:$0xff]
  %v602 = vld [vmem:[%s590 + $0x58] sm:$0xff]
  %v603 = vld [vmem:[%s590 + $0x60] sm:$0xff]
  %v604 = vld [vmem:[%s590 + $0x68] sm:$0xff]
  %v605 = vld [vmem:[%s590 + $0x70] sm:$0xff]
  %v606 = vld [vmem:[%s590 + $0x78] sm:$0xff]
  %s607 = scalar_lea.vmem %s1, 96
  %v608 = vld [vmem:[%s607] sm:$0xff]
  %v609 = vld [vmem:[%s607 + $0x8] sm:$0xff]
  %v610 = vld [vmem:[%s607 + $0x10] sm:$0xff]
  %v611 = vld [vmem:[%s607 + $0x18] sm:$0xff]
  %v612 = vld [vmem:[%s607 + $0x20] sm:$0xff]
  %v613 = vld [vmem:[%s607 + $0x28] sm:$0xff]
  %v615 = vsel %vm42, %v591, 0
  %v618 = vsel %vm42, %v592, 0
  %v621 = vsel %vm42, %v593, 0
  %v624 = vsel %vm42, %v594, 0
  %v627 = vsel %vm42, %v595, 0
  %v630 = vsel %vm42, %v596, 0
  %v633 = vsel %vm42, %v597, 0
  %v636 = vsel %vm42, %v598, 0
  %v639 = vsel %vm42, %v599, 0
  %v642 = vsel %vm42, %v600, 0
  %v645 = vsel %vm42, %v601, 0
  %v648 = vsel %vm42, %v602, 0
  %v651 = vsel %vm42, %v603, 0
  %v654 = vsel %vm42, %v604, 0
  %v657 = vsel %vm42, %v605, 0
  %v660 = vsel %vm42, %v606, 0
  %662 = vmatprep.subr.mxu0 0.0
  %663 = vmatpush1.msra.mxu0 0.0
  %664 = vmatprep.subr.mxu0 0.0
  %665 = vmatpush1.msra.mxu0 0.0
  %666 = vmatprep.subr.mxu0 0.0
  %667 = vmatpush1.msra.mxu0 0.0
  %668 = vmatprep.subr.mxu0 0.0
  %669 = vmatpush1.msra.mxu0 0.0
  %670 = vmatprep.subr.mxu0 0.0
  %671 = vmatpush1.msra.mxu0 0.0
  %672 = vmatprep.subr.mxu0 0.0
  %673 = vmatpush1.msra.mxu0 0.0
  %674 = vmatprep.subr.mxu0 0.0
  %675 = vmatpush1.msra.mxu0 0.0
  %676 = vmatprep.subr.mxu0 0.0
  %677 = vmatpush1.msra.mxu0 0.0
  %678 = vmatprep.subr.mxu0 0.0
  %679 = vmatpush1.msra.mxu0 0.0
  %680 = vmatprep.subr.mxu0 0.0
  %681 = vmatpush1.msra.mxu0 0.0
  %682 = vmatprep.subr.mxu0 0.0
  %683 = vmatpush1.msra.mxu0 %v613
  %684 = vmatprep.subr.mxu0 0.0
  %685 = vmatpush1.msra.mxu0 %v612
  %686 = vmatprep.subr.mxu0 0.0
  %687 = vmatpush1.msra.mxu0 %v611
  %688 = vmatprep.subr.mxu0 0.0
  %689 = vmatpush1.msra.mxu0 %v610
  %690 = vmatprep.subr.mxu0 0.0
  %691 = vmatpush1.msra.mxu0 %v609
  %692 = vmatprep.subr.mxu0 0.0
  %693 = vmatpush1.msra.mxu0 %v608
  %694 = vmatprep.subr.mxu0 0.0
  %695 = vmatpush2.msra.mxu0 0.0
  %696 = vmatprep.subr.mxu0 0.0
  %697 = vmatpush2.msra.mxu0 0.0
  %698 = vmatprep.subr.mxu0 0.0
  %699 = vmatpush2.msra.mxu0 0.0
  %700 = vmatprep.subr.mxu0 0.0
  %701 = vmatpush2.msra.mxu0 0.0
  %702 = vmatprep.subr.mxu0 0.0
  %703 = vmatpush2.msra.mxu0 0.0
  %704 = vmatprep.subr.mxu0 0.0
  %705 = vmatpush2.msra.mxu0 0.0
  %706 = vmatprep.subr.mxu0 0.0
  %707 = vmatpush2.msra.mxu0 0.0
  %708 = vmatprep.subr.mxu0 0.0
  %709 = vmatpush2.msra.mxu0 0.0
  %710 = vmatprep.subr.mxu0 0.0
  %711 = vmatpush2.msra.mxu0 0.0
  %712 = vmatprep.subr.mxu0 0.0
  %713 = vmatpush2.msra.mxu0 0.0
  %714 = vmatprep.subr.mxu0 0.0
  %715 = vmatpush2.msra.mxu0 0.0
  %716 = vmatprep.subr.mxu0 0.0
  %717 = vmatpush2.msra.mxu0 0.0
  %718 = vmatprep.subr.mxu0 0.0
  %719 = vmatpush2.msra.mxu0 0.0
  %720 = vmatprep.subr.mxu0 0.0
  %721 = vmatpush2.msra.mxu0 0.0
  %722 = vmatprep.subr.mxu0 0.0
  %723 = vmatpush2.msra.mxu0 0.0
  %724 = vmatprep.subr.mxu0 0.0
  %725 = vmatpush2.msra.mxu0 0.0
  %726 = vmatprep.mubr.f32.mxu0 0.0
  %727 = vmatmul.mubr.f32.gmra.mxu0 %v615
  %v728 = vpop.f32.mrf.mxu0
  %v729 = vadd.f32 0.0, %v728
  %v730 = vpop.f32.mrf.mxu0
  %731 = vmatprep.mubr.f32.mxu0 0.0
  %732 = vmatmul.mubr.f32.gmra.mxu0 %v618
  %v733 = vpop.f32.mrf.mxu0
  %v734 = vadd.f32 0.0, %v733
  %v735 = vpop.f32.mrf.mxu0
  %736 = vmatprep.mubr.f32.mxu0 0.0
  %737 = vmatmul.mubr.f32.gmra.mxu0 %v621
  %v738 = vpop.f32.mrf.mxu0
  %v739 = vadd.f32 0.0, %v738
  %v740 = vpop.f32.mrf.mxu0
  %741 = vmatprep.mubr.f32.mxu0 0.0
  %742 = vmatmul.mubr.f32.gmra.mxu0 %v624
  %v743 = vpop.f32.mrf.mxu0
  %v744 = vadd.f32 0.0, %v743
  %v745 = vpop.f32.mrf.mxu0
  %746 = vmatprep.mubr.f32.mxu0 0.0
  %747 = vmatmul.mubr.f32.gmra.mxu0 %v627
  %v748 = vpop.f32.mrf.mxu0
  %v749 = vadd.f32 0.0, %v748
  %v750 = vpop.f32.mrf.mxu0
  %751 = vmatprep.mubr.f32.mxu0 0.0
  %752 = vmatmul.mubr.f32.gmra.mxu0 %v630
  %v753 = vpop.f32.mrf.mxu0
  %v754 = vadd.f32 0.0, %v753
  %v755 = vpop.f32.mrf.mxu0
  %756 = vmatprep.mubr.f32.mxu0 0.0
  %757 = vmatmul.mubr.f32.gmra.mxu0 %v633
  %v758 = vpop.f32.mrf.mxu0
  %v759 = vadd.f32 0.0, %v758
  %v760 = vpop.f32.mrf.mxu0
  %761 = vmatprep.mubr.f32.mxu0 0.0
  %762 = vmatmul.mubr.f32.gmra.mxu0 %v636
  %v763 = vpop.f32.mrf.mxu0
  %v764 = vadd.f32 0.0, %v763
  %v765 = vpop.f32.mrf.mxu0
  %766 = vmatprep.mubr.f32.mxu0 0.0
  %767 = vmatmul.mubr.f32.gmra.mxu0 %v639
  %v768 = vpop.f32.mrf.mxu0
  %v769 = vadd.f32 0.0, %v768
  %v770 = vpop.f32.mrf.mxu0
  %771 = vmatprep.mubr.f32.mxu0 0.0
  %772 = vmatmul.mubr.f32.gmra.mxu0 %v642
  %v773 = vpop.f32.mrf.mxu0
  %v774 = vadd.f32 0.0, %v773
  %v775 = vpop.f32.mrf.mxu0
  %776 = vmatprep.mubr.f32.mxu0 0.0
  %777 = vmatmul.mubr.f32.gmra.mxu0 %v645
  %v778 = vpop.f32.mrf.mxu0
  %v779 = vadd.f32 0.0, %v778
  %v780 = vpop.f32.mrf.mxu0
  %781 = vmatprep.mubr.f32.mxu0 0.0
  %782 = vmatmul.mubr.f32.gmra.mxu0 %v648
  %v783 = vpop.f32.mrf.mxu0
  %v784 = vadd.f32 0.0, %v783
  %v785 = vpop.f32.mrf.mxu0
  %786 = vmatprep.mubr.f32.mxu0 0.0
  %787 = vmatmul.mubr.f32.gmra.mxu0 %v651
  %v788 = vpop.f32.mrf.mxu0
  %v789 = vadd.f32 0.0, %v788
  %v790 = vpop.f32.mrf.mxu0
  %791 = vmatprep.mubr.f32.mxu0 0.0
  %792 = vmatmul.mubr.f32.gmra.mxu0 %v654
  %v793 = vpop.f32.mrf.mxu0
  %v794 = vadd.f32 0.0, %v793
  %v795 = vpop.f32.mrf.mxu0
  %796 = vmatprep.mubr.f32.mxu0 0.0
  %797 = vmatmul.mubr.f32.gmra.mxu0 %v657
  %v798 = vpop.f32.mrf.mxu0
  %v799 = vadd.f32 0.0, %v798
  %v800 = vpop.f32.mrf.mxu0
  %801 = vmatprep.mubr.f32.mxu0 0.0
  %802 = vmatmul.mubr.f32.gmra.mxu0 %v660
  %v803 = vpop.f32.mrf.mxu0
  %v804 = vadd.f32 0.0, %v803
  %v805 = vpop.f32.mrf.mxu0
  %806 = vdwg.mxu0
  %807 = vxpose.xlu0.b32.start [1/16] %v729, 128
  %808 = vxpose.xlu0.b32.cont [2/16] %v734, 128
  %809 = vxpose.xlu0.b32.cont [3/16] %v739, 128
  %810 = vxpose.xlu0.b32.cont [4/16] %v744, 128
  %811 = vxpose.xlu0.b32.cont [5/16] %v749, 128
  %812 = vxpose.xlu0.b32.cont [6/16] %v754, 128
  %813 = vxpose.xlu0.b32.cont [7/16] %v759, 128
  %814 = vxpose.xlu0.b32.cont [8/16] %v764, 128
  %815 = vxpose.xlu0.b32.cont [9/16] %v769, 128
  %816 = vxpose.xlu0.b32.cont [10/16] %v774, 128
  %817 = vxpose.xlu0.b32.cont [11/16] %v779, 128
  %818 = vxpose.xlu0.b32.cont [12/16] %v784, 128
  %819 = vxpose.xlu0.b32.cont [13/16] %v789, 128
  %820 = vxpose.xlu0.b32.cont [14/16] %v794, 128
  %821 = vxpose.xlu0.b32.cont [15/16] %v799, 128
  %822 = vxpose.xlu0.b32.end [16/16] %v804, 128
  %v823 = vpop.trf.xlu0
  %v824 = vpop.trf.xlu0
  %v825 = vpop.trf.xlu0
  %v826 = vpop.trf.xlu0
  %v827 = vpop.trf.xlu0
  %v828 = vpop.trf.xlu0
  %v829 = vpop.trf.xlu0
  %v830 = vpop.trf.xlu0
  %v831 = vpop.trf.xlu0
  %v832 = vpop.trf.xlu0
  %v833 = vpop.trf.xlu0
  %v834 = vpop.trf.xlu0
  %v835 = vpop.trf.xlu0
  %v836 = vpop.trf.xlu0
  %v837 = vpop.trf.xlu0
  %v838 = vpop.trf.xlu0
  %s839 = scalar_lea.vmem %s2, 64
  %v840 = vld [vmem:[%s839] sm:$0xff]
  %v841 = vld [vmem:[%s839 + $0x8] sm:$0xff]
  %v842 = vld [vmem:[%s839 + $0x10] sm:$0xff]
  %v843 = vld [vmem:[%s839 + $0x18] sm:$0xff]
  %845 = vset.pattern.permute.xlu0 0
  %846 = vperm.xlu0 %845, %v840
  %v847 = vpop.permute.xlu0 %846
  %850 = vset.pattern.permute.xlu0 0
  %851 = vperm.xlu0 %850, %v841
  %v852 = vpop.permute.xlu0 %851
  %855 = vset.pattern.permute.xlu0 0
  %856 = vperm.xlu0 %855, %v842
  %v857 = vpop.permute.xlu0 %856
  %860 = vset.pattern.permute.xlu0 0
  %861 = vperm.xlu0 %860, %v843
  %v862 = vpop.permute.xlu0 %861
  %v864 = vadd.f32 %v823, %v847
  %v865 = vadd.f32 %v824, %v852
  %v866 = vadd.f32 %v825, %v857
  %v867 = vadd.f32 %v826, %v862
  %v868 = vmax.f32 %v864, 0.0
  %v869 = vmax.f32 %v865, 0.0
  %v870 = vmax.f32 %v866, 0.0
  %v871 = vmax.f32 %v867, 0.0
  %872 = vst [vmem:[#allocation2 + $0x40] sm:$0xff] %v868
  %873 = vst [vmem:[#allocation2 + $0x48] sm:$0xff] %v869
  %874 = vst [vmem:[#allocation2 + $0x50] sm:$0xff] %v870
  %875 = vst [vmem:[#allocation2 + $0x58] sm:$0xff] %v871
  %v876 = vmul.f32 %v296, %v582
  %v877 = vmul.f32 %v297, %v583
  %v878 = vmul.f32 %v298, %v584
  %v879 = vmul.f32 %v299, %v585
  %880 = vst [vmem:[#allocation2 + $0x60] sm:$0xff] %v876
  %881 = vst [vmem:[#allocation2 + $0x68] sm:$0xff] %v877
  %882 = vst [vmem:[#allocation2 + $0x70] sm:$0xff] %v878
  %883 = vst [vmem:[#allocation2 + $0x78] sm:$0xff] %v879
  %v884 = vmul.f32 %v296, %v868
  %v885 = vmul.f32 %v297, %v869
  %v886 = vmul.f32 %v298, %v870
  %v887 = vmul.f32 %v299, %v871
  %888 = vst [vmem:[#allocation2 + $0x80] sm:$0xff] %v884
  %889 = vst [vmem:[#allocation2 + $0x88] sm:$0xff] %v885
  %890 = vst [vmem:[#allocation2 + $0x90] sm:$0xff] %v886
  %891 = vst [vmem:[#allocation2 + $0x98] sm:$0xff] %v887
  %v892 = vmul.f32 %v582, %v868
  %v893 = vmul.f32 %v583, %v869
  %v894 = vmul.f32 %v584, %v870
  %v895 = vmul.f32 %v585, %v871
  %896 = vst [vmem:[#allocation2 + $0xa0] sm:$0xff] %v892
  %897 = vst [vmem:[#allocation2 + $0xa8] sm:$0xff] %v893
  %898 = vst [vmem:[#allocation2 + $0xb0] sm:$0xff] %v894
  %899 = vst [vmem:[#allocation2 + $0xb8] sm:$0xff] %v895
  %v900 = vld [vmem:[%s3] sm:$0xff]
  %v901 = vld [vmem:[%s3 + $0x8] sm:$0xff]
  %v902 = vld [vmem:[%s3 + $0x10] sm:$0xff]
  %v903 = vld [vmem:[%s3 + $0x18] sm:$0xff]
  %v904 = vld [vmem:[%s3 + $0x20] sm:$0xff]
  %v905 = vld [vmem:[%s3 + $0x28] sm:$0xff]
  %v906 = vld [vmem:[%s3 + $0x30] sm:$0xff]
  %v907 = vld [vmem:[%s3 + $0x38] sm:$0xff]
  %v908 = vld [vmem:[%s3 + $0x40] sm:$0xff]
  %v909 = vld [vmem:[%s3 + $0x48] sm:$0xff]
  %v910 = vld [vmem:[%s3 + $0x50] sm:$0xff]
  %v911 = vld [vmem:[%s3 + $0x58] sm:$0xff]
  %v912 = vld [vmem:[%s3 + $0x60] sm:$0xff]
  %v913 = vld [vmem:[%s3 + $0x68] sm:$0xff]
  %v914 = vld [vmem:[%s3 + $0x70] sm:$0xff]
  %v915 = vld [vmem:[%s3 + $0x78] sm:$0xff]
  %v916 = vld [vmem:[%s3 + $0x80] sm:$0xff]
  %v917 = vld [vmem:[%s3 + $0x88] sm:$0xff]
  %v918 = vld [vmem:[%s3 + $0x90] sm:$0xff]
  %v919 = vld [vmem:[%s3 + $0x98] sm:$0xff]
  %v920 = vld [vmem:[%s3 + $0xa0] sm:$0xff]
  %v921 = vld [vmem:[%s3 + $0xa8] sm:$0xff]
  %v922 = vld [vmem:[%s3 + $0xb0] sm:$0xff]
  %v923 = vld [vmem:[%s3 + $0xb8] sm:$0xff]
  %v924 = vld [vmem:[%s3 + $0xc0] sm:$0xff]
  %v925 = vld [vmem:[%s3 + $0xc8] sm:$0xff]
  %v926 = vld [vmem:[%s3 + $0xd0] sm:$0xff]
  %v927 = vld [vmem:[%s3 + $0xd8] sm:$0xff]
  %v928 = vld [vmem:[%s3 + $0xe0] sm:$0xff]
  %v929 = vld [vmem:[%s3 + $0xe8] sm:$0xff]
  %v930 = vld [vmem:[%s3 + $0xf0] sm:$0xff]
  %v931 = vld [vmem:[%s3 + $0xf8] sm:$0xff]
  %v932 = vld [vmem:[%s3 + $0x100] sm:$0xff]
  %v933 = vld [vmem:[%s3 + $0x108] sm:$0xff]
  %v934 = vld [vmem:[%s3 + $0x110] sm:$0xff]
  %v935 = vld [vmem:[%s3 + $0x118] sm:$0xff]
  %v936 = vld [vmem:[%s3 + $0x120] sm:$0xff]
  %v937 = vld [vmem:[%s3 + $0x128] sm:$0xff]
  %v938 = vld [vmem:[%s3 + $0x130] sm:$0xff]
  %v939 = vld [vmem:[%s3 + $0x138] sm:$0xff]
  %v940 = vld [vmem:[%s3 + $0x140] sm:$0xff]
  %v941 = vld [vmem:[%s3 + $0x148] sm:$0xff]
  %v942 = vld [vmem:[%s3 + $0x150] sm:$0xff]
  %v943 = vld [vmem:[%s3 + $0x158] sm:$0xff]
  %v944 = vld [vmem:[%s3 + $0x160] sm:$0xff]
  %v945 = vld [vmem:[%s3 + $0x168] sm:$0xff]
  %v946 = vld [vmem:[%s3 + $0x170] sm:$0xff]
  %v947 = vld [vmem:[%s3 + $0x178] sm:$0xff]
  %v948 = vld [vmem:[#allocation2] sm:$0xff]
  %v949 = vld [vmem:[#allocation2 + $0x8] sm:$0xff]
  %v950 = vld [vmem:[#allocation2 + $0x10] sm:$0xff]
  %v951 = vld [vmem:[#allocation2 + $0x18] sm:$0xff]
  %v952 = vld [vmem:[#allocation2 + $0x20] sm:$0xff]
  %v953 = vld [vmem:[#allocation2 + $0x28] sm:$0xff]
  %v954 = vld [vmem:[#allocation2 + $0x30] sm:$0xff]
  %v955 = vld [vmem:[#allocation2 + $0x38] sm:$0xff]
  %v956 = vld [vmem:[#allocation2 + $0x40] sm:$0xff]
  %v957 = vld [vmem:[#allocation2 + $0x48] sm:$0xff]
  %v958 = vld [vmem:[#allocation2 + $0x50] sm:$0xff]
  %v959 = vld [vmem:[#allocation2 + $0x58] sm:$0xff]
  %v960 = vld [vmem:[#allocation2 + $0x60] sm:$0xff]
  %v961 = vld [vmem:[#allocation2 + $0x68] sm:$0xff]
  %v962 = vld [vmem:[#allocation2 + $0x70] sm:$0xff]
  %v963 = vld [vmem:[#allocation2 + $0x78] sm:$0xff]
  %v964 = vld [vmem:[#allocation2 + $0x80] sm:$0xff]
  %v965 = vld [vmem:[#allocation2 + $0x88] sm:$0xff]
  %v966 = vld [vmem:[#allocation2 + $0x90] sm:$0xff]
  %v967 = vld [vmem:[#allocation2 + $0x98] sm:$0xff]
  %v968 = vld [vmem:[#allocation2 + $0xa0] sm:$0xff]
  %v969 = vld [vmem:[#allocation2 + $0xa8] sm:$0xff]
  %v970 = vld [vmem:[#allocation2 + $0xb0] sm:$0xff]
  %v971 = vld [vmem:[#allocation2 + $0xb8] sm:$0xff]
  %v972 = vld [vmem:[%s4] sm:$0xff]
  %v973 = vld [vmem:[%s4 + $0x8] sm:$0xff]
  %v974 = vld [vmem:[%s4 + $0x10] sm:$0xff]
  %v975 = vld [vmem:[%s4 + $0x18] sm:$0xff]
  %v976 = vld [vmem:[%s4 + $0x20] sm:$0xff]
  %v977 = vld [vmem:[%s4 + $0x28] sm:$0xff]
  %v978 = vld [vmem:[%s4 + $0x30] sm:$0xff]
  %v979 = vld [vmem:[%s4 + $0x38] sm:$0xff]
  %v980 = vld [vmem:[%s4 + $0x40] sm:$0xff]
  %v981 = vld [vmem:[%s4 + $0x48] sm:$0xff]
  %v982 = vld [vmem:[%s4 + $0x50] sm:$0xff]
  %v983 = vld [vmem:[%s4 + $0x58] sm:$0xff]
  %v984 = vld [vmem:[%s4 + $0x60] sm:$0xff]
  %v985 = vld [vmem:[%s4 + $0x68] sm:$0xff]
  %v986 = vld [vmem:[%s4 + $0x70] sm:$0xff]
  %v987 = vld [vmem:[%s4 + $0x78] sm:$0xff]
  %v988 = vld [vmem:[%s4 + $0x80] sm:$0xff]
  %v989 = vld [vmem:[%s4 + $0x88] sm:$0xff]
  %v990 = vld [vmem:[%s4 + $0x90] sm:$0xff]
  %v991 = vld [vmem:[%s4 + $0x98] sm:$0xff]
  %v992 = vld [vmem:[%s4 + $0xa0] sm:$0xff]
  %v993 = vld [vmem:[%s4 + $0xa8] sm:$0xff]
  %v994 = vld [vmem:[%s4 + $0xb0] sm:$0xff]
  %v995 = vld [vmem:[%s4 + $0xb8] sm:$0xff]
  %997 = vset.pattern.permute.xlu0 0
  %998 = vperm.xlu0 %997, %v972
  %v999 = vpop.permute.xlu0 %998
  %1002 = vset.pattern.permute.xlu0 0
  %1003 = vperm.xlu0 %1002, %v973
  %v1004 = vpop.permute.xlu0 %1003
  %1007 = vset.pattern.permute.xlu0 0
  %1008 = vperm.xlu0 %1007, %v974
  %v1009 = vpop.permute.xlu0 %1008
  %1012 = vset.pattern.permute.xlu0 0
  %1013 = vperm.xlu0 %1012, %v975
  %v1014 = vpop.permute.xlu0 %1013
  %1017 = vset.pattern.permute.xlu0 0
  %1018 = vperm.xlu0 %1017, %v976
  %v1019 = vpop.permute.xlu0 %1018
  %1022 = vset.pattern.permute.xlu0 0
  %1023 = vperm.xlu0 %1022, %v977
  %v1024 = vpop.permute.xlu0 %1023
  %1027 = vset.pattern.permute.xlu0 0
  %1028 = vperm.xlu0 %1027, %v978
  %v1029 = vpop.permute.xlu0 %1028
  %1032 = vset.pattern.permute.xlu0 0
  %1033 = vperm.xlu0 %1032, %v979
  %v1034 = vpop.permute.xlu0 %1033
  %1037 = vset.pattern.permute.xlu0 0
  %1038 = vperm.xlu0 %1037, %v980
  %v1039 = vpop.permute.xlu0 %1038
  %1042 = vset.pattern.permute.xlu0 0
  %1043 = vperm.xlu0 %1042, %v981
  %v1044 = vpop.permute.xlu0 %1043
  %1047 = vset.pattern.permute.xlu0 0
  %1048 = vperm.xlu0 %1047, %v982
  %v1049 = vpop.permute.xlu0 %1048
  %1052 = vset.pattern.permute.xlu0 0
  %1053 = vperm.xlu0 %1052, %v983
  %v1054 = vpop.permute.xlu0 %1053
  %1057 = vset.pattern.permute.xlu0 0
  %1058 = vperm.xlu0 %1057, %v984
  %v1059 = vpop.permute.xlu0 %1058
  %1062 = vset.pattern.permute.xlu0 0
  %1063 = vperm.xlu0 %1062, %v985
  %v1064 = vpop.permute.xlu0 %1063
  %1067 = vset.pattern.permute.xlu0 0
  %1068 = vperm.xlu0 %1067, %v986
  %v1069 = vpop.permute.xlu0 %1068
  %1072 = vset.pattern.permute.xlu0 0
  %1073 = vperm.xlu0 %1072, %v987
  %v1074 = vpop.permute.xlu0 %1073
  %1077 = vset.pattern.permute.xlu0 0
  %1078 = vperm.xlu0 %1077, %v988
  %v1079 = vpop.permute.xlu0 %1078
  %1082 = vset.pattern.permute.xlu0 0
  %1083 = vperm.xlu0 %1082, %v989
  %v1084 = vpop.permute.xlu0 %1083
  %1087 = vset.pattern.permute.xlu0 0
  %1088 = vperm.xlu0 %1087, %v990
  %v1089 = vpop.permute.xlu0 %1088
  %1092 = vset.pattern.permute.xlu0 0
  %1093 = vperm.xlu0 %1092, %v991
  %v1094 = vpop.permute.xlu0 %1093
  %1097 = vset.pattern.permute.xlu0 0
  %1098 = vperm.xlu0 %1097, %v992
  %v1099 = vpop.permute.xlu0 %1098
  %1102 = vset.pattern.permute.xlu0 0
  %1103 = vperm.xlu0 %1102, %v993
  %v1104 = vpop.permute.xlu0 %1103
  %1107 = vset.pattern.permute.xlu0 0
  %1108 = vperm.xlu0 %1107, %v994
  %v1109 = vpop.permute.xlu0 %1108
  %1112 = vset.pattern.permute.xlu0 0
  %1113 = vperm.xlu0 %1112, %v995
  %v1114 = vpop.permute.xlu0 %1113
  %vm1116 = vcmask 523264
  %v1118 = vsel %vm1116, %v901, 0
  %v1121 = vsel %vm1116, %v903, 0
  %v1124 = vsel %vm1116, %v905, 0
  %v1127 = vsel %vm1116, %v907, 0
  %v1130 = vsel %vm1116, %v909, 0
  %v1133 = vsel %vm1116, %v911, 0
  %v1136 = vsel %vm1116, %v913, 0
  %v1139 = vsel %vm1116, %v915, 0
  %v1142 = vsel %vm1116, %v917, 0
  %v1145 = vsel %vm1116, %v919, 0
  %v1148 = vsel %vm1116, %v921, 0
  %v1151 = vsel %vm1116, %v923, 0
  %v1154 = vsel %vm1116, %v925, 0
  %v1157 = vsel %vm1116, %v927, 0
  %v1160 = vsel %vm1116, %v929, 0
  %v1163 = vsel %vm1116, %v931, 0
  %v1166 = vsel %vm1116, %v933, 0
  %v1169 = vsel %vm1116, %v935, 0
  %v1172 = vsel %vm1116, %v937, 0
  %v1175 = vsel %vm1116, %v939, 0
  %v1178 = vsel %vm1116, %v941, 0
  %v1181 = vsel %vm1116, %v943, 0
  %v1184 = vsel %vm1116, %v945, 0
  %v1187 = vsel %vm1116, %v947, 0
  %1189 = vmatprep.subr.mxu0 0.0
  %1190 = vmatpush1.msra.mxu0 %v963
  %1191 = vmatprep.subr.mxu0 0.0
  %1192 = vmatpush1.msra.mxu0 %v962
  %1193 = vmatprep.subr.mxu0 0.0
  %1194 = vmatpush1.msra.mxu0 %v961
  %1195 = vmatprep.subr.mxu0 0.0
  %1196 = vmatpush1.msra.mxu0 %v960
  %1197 = vmatprep.subr.mxu0 0.0
  %1198 = vmatpush1.msra.mxu0 %v959
  %1199 = vmatprep.subr.mxu0 0.0
  %1200 = vmatpush1.msra.mxu0 %v958
  %1201 = vmatprep.subr.mxu0 0.0
  %1202 = vmatpush1.msra.mxu0 %v957
  %1203 = vmatprep.subr.mxu0 0.0
  %1204 = vmatpush1.msra.mxu0 %v956
  %1205 = vmatprep.subr.mxu0 0.0
  %1206 = vmatpush1.msra.mxu0 %v955
  %1207 = vmatprep.subr.mxu0 0.0
  %1208 = vmatpush1.msra.mxu0 %v954
  %1209 = vmatprep.subr.mxu0 0.0
  %1210 = vmatpush1.msra.mxu0 %v953
  %1211 = vmatprep.subr.mxu0 0.0
  %1212 = vmatpush1.msra.mxu0 %v952
  %1213 = vmatprep.subr.mxu0 0.0
  %1214 = vmatpush1.msra.mxu0 %v951
  %1215 = vmatprep.subr.mxu0 0.0
  %1216 = vmatpush1.msra.mxu0 %v950
  %1217 = vmatprep.subr.mxu0 0.0
  %1218 = vmatpush1.msra.mxu0 %v949
  %1219 = vmatprep.subr.mxu0 0.0
  %1220 = vmatpush1.msra.mxu0 %v948
  %1221 = vmatprep.subr.mxu0 0.0
  %1222 = vmatpush2.msra.mxu0 0.0
  %1223 = vmatprep.subr.mxu0 0.0
  %1224 = vmatpush2.msra.mxu0 0.0
  %1225 = vmatprep.subr.mxu0 0.0
  %1226 = vmatpush2.msra.mxu0 0.0
  %1227 = vmatprep.subr.mxu0 0.0
  %1228 = vmatpush2.msra.mxu0 0.0
  %1229 = vmatprep.subr.mxu0 0.0
  %1230 = vmatpush2.msra.mxu0 0.0
  %1231 = vmatprep.subr.mxu0 0.0
  %1232 = vmatpush2.msra.mxu0 0.0
  %1233 = vmatprep.subr.mxu0 0.0
  %1234 = vmatpush2.msra.mxu0 0.0
  %1235 = vmatprep.subr.mxu0 0.0
  %1236 = vmatpush2.msra.mxu0 0.0
  %1237 = vmatprep.subr.mxu0 0.0
  %1238 = vmatpush2.msra.mxu0 %v971
  %1239 = vmatprep.subr.mxu0 0.0
  %1240 = vmatpush2.msra.mxu0 %v970
  %1241 = vmatprep.subr.mxu0 0.0
  %1242 = vmatpush2.msra.mxu0 %v969
  %1243 = vmatprep.subr.mxu0 0.0
  %1244 = vmatpush2.msra.mxu0 %v968
  %1245 = vmatprep.subr.mxu0 0.0
  %1246 = vmatpush2.msra.mxu0 %v967
  %1247 = vmatprep.subr.mxu0 0.0
  %1248 = vmatpush2.msra.mxu0 %v966
  %1249 = vmatprep.subr.mxu0 0.0
  %1250 = vmatpush2.msra.mxu0 %v965
  %1251 = vmatprep.subr.mxu0 0.0
  %1252 = vmatpush2.msra.mxu0 %v964
  %1253 = vmatprep.mubr.f32.mxu0 %v1118
  %1254 = vmatmul.mubr.f32.gmra.mxu0 %v900
  %v1255 = vpop.f32.mrf.mxu0
  %v1256 = vadd.f32 %v999, %v1255
  %v1257 = vpop.f32.mrf.mxu0
  %1258 = vmatprep.mubr.f32.mxu0 %v1121
  %1259 = vmatmul.mubr.f32.gmra.mxu0 %v902
  %v1260 = vpop.f32.mrf.mxu0
  %v1261 = vadd.f32 %v1004, %v1260
  %v1262 = vpop.f32.mrf.mxu0
  %1263 = vmatprep.mubr.f32.mxu0 %v1124
  %1264 = vmatmul.mubr.f32.gmra.mxu0 %v904
  %v1265 = vpop.f32.mrf.mxu0
  %v1266 = vadd.f32 %v1009, %v1265
  %v1267 = vpop.f32.mrf.mxu0
  %1268 = vmatprep.mubr.f32.mxu0 %v1127
  %1269 = vmatmul.mubr.f32.gmra.mxu0 %v906
  %v1270 = vpop.f32.mrf.mxu0
  %v1271 = vadd.f32 %v1014, %v1270
  %v1272 = vpop.f32.mrf.mxu0
  %1273 = vmatprep.mubr.f32.mxu0 %v1130
  %1274 = vmatmul.mubr.f32.gmra.mxu0 %v908
  %v1275 = vpop.f32.mrf.mxu0
  %v1276 = vadd.f32 %v1019, %v1275
  %v1277 = vpop.f32.mrf.mxu0
  %1278 = vmatprep.mubr.f32.mxu0 %v1133
  %1279 = vmatmul.mubr.f32.gmra.mxu0 %v910
  %v1280 = vpop.f32.mrf.mxu0
  %v1281 = vadd.f32 %v1024, %v1280
  %v1282 = vpop.f32.mrf.mxu0
  %1283 = vmatprep.mubr.f32.mxu0 %v1136
  %1284 = vmatmul.mubr.f32.gmra.mxu0 %v912
  %v1285 = vpop.f32.mrf.mxu0
  %v1286 = vadd.f32 %v1029, %v1285
  %v1287 = vpop.f32.mrf.mxu0
  %1288 = vmatprep.mubr.f32.mxu0 %v1139
  %1289 = vmatmul.mubr.f32.gmra.mxu0 %v914
  %v1290 = vpop.f32.mrf.mxu0
  %v1291 = vadd.f32 %v1034, %v1290
  %v1292 = vpop.f32.mrf.mxu0
  %1293 = vmatprep.mubr.f32.mxu0 %v1142
  %1294 = vmatmul.mubr.f32.gmra.mxu0 %v916
  %v1295 = vpop.f32.mrf.mxu0
  %v1296 = vadd.f32 %v1039, %v1295
  %v1297 = vpop.f32.mrf.mxu0
  %1298 = vmatprep.mubr.f32.mxu0 %v1145
  %1299 = vmatmul.mubr.f32.gmra.mxu0 %v918
  %v1300 = vpop.f32.mrf.mxu0
  %v1301 = vadd.f32 %v1044, %v1300
  %v1302 = vpop.f32.mrf.mxu0
  %1303 = vmatprep.mubr.f32.mxu0 %v1148
  %1304 = vmatmul.mubr.f32.gmra.mxu0 %v920
  %v1305 = vpop.f32.mrf.mxu0
  %v1306 = vadd.f32 %v1049, %v1305
  %v1307 = vpop.f32.mrf.mxu0
  %1308 = vmatprep.mubr.f32.mxu0 %v1151
  %1309 = vmatmul.mubr.f32.gmra.mxu0 %v922
  %v1310 = vpop.f32.mrf.mxu0
  %v1311 = vadd.f32 %v1054, %v1310
  %v1312 = vpop.f32.mrf.mxu0
  %1313 = vmatprep.mubr.f32.mxu0 %v1154
  %1314 = vmatmul.mubr.f32.gmra.mxu0 %v924
  %v1315 = vpop.f32.mrf.mxu0
  %v1316 = vadd.f32 %v1059, %v1315
  %v1317 = vpop.f32.mrf.mxu0
  %1318 = vmatprep.mubr.f32.mxu0 %v1157
  %1319 = vmatmul.mubr.f32.gmra.mxu0 %v926
  %v1320 = vpop.f32.mrf.mxu0
  %v1321 = vadd.f32 %v1064, %v1320
  %v1322 = vpop.f32.mrf.mxu0
  %1323 = vmatprep.mubr.f32.mxu0 %v1160
  %1324 = vmatmul.mubr.f32.gmra.mxu0 %v928
  %v1325 = vpop.f32.mrf.mxu0
  %v1326 = vadd.f32 %v1069, %v1325
  %v1327 = vpop.f32.mrf.mxu0
  %1328 = vmatprep.mubr.f32.mxu0 %v1163
  %1329 = vmatmul.mubr.f32.gmra.mxu0 %v930
  %v1330 = vpop.f32.mrf.mxu0
  %v1331 = vadd.f32 %v1074, %v1330
  %v1332 = vpop.f32.mrf.mxu0
  %1333 = vmatprep.mubr.f32.mxu0 %v1166
  %1334 = vmatmul.mubr.f32.gmra.mxu0 %v932
  %v1335 = vpop.f32.mrf.mxu0
  %v1336 = vadd.f32 %v1079, %v1335
  %v1337 = vpop.f32.mrf.mxu0
  %1338 = vmatprep.mubr.f32.mxu0 %v1169
  %1339 = vmatmul.mubr.f32.gmra.mxu0 %v934
  %v1340 = vpop.f32.mrf.mxu0
  %v1341 = vadd.f32 %v1084, %v1340
  %v1342 = vpop.f32.mrf.mxu0
  %1343 = vmatprep.mubr.f32.mxu0 %v1172
  %1344 = vmatmul.mubr.f32.gmra.mxu0 %v936
  %v1345 = vpop.f32.mrf.mxu0
  %v1346 = vadd.f32 %v1089, %v1345
  %v1347 = vpop.f32.mrf.mxu0
  %1348 = vmatprep.mubr.f32.mxu0 %v1175
  %1349 = vmatmul.mubr.f32.gmra.mxu0 %v938
  %v1350 = vpop.f32.mrf.mxu0
  %v1351 = vadd.f32 %v1094, %v1350
  %v1352 = vpop.f32.mrf.mxu0
  %1353 = vmatprep.mubr.f32.mxu0 %v1178
  %1354 = vmatmul.mubr.f32.gmra.mxu0 %v940
  %v1355 = vpop.f32.mrf.mxu0
  %v1356 = vadd.f32 %v1099, %v1355
  %v1357 = vpop.f32.mrf.mxu0
  %1358 = vmatprep.mubr.f32.mxu0 %v1181
  %1359 = vmatmul.mubr.f32.gmra.mxu0 %v942
  %v1360 = vpop.f32.mrf.mxu0
  %v1361 = vadd.f32 %v1104, %v1360
  %v1362 = vpop.f32.mrf.mxu0
  %1363 = vmatprep.mubr.f32.mxu0 %v1184
  %1364 = vmatmul.mubr.f32.gmra.mxu0 %v944
  %v1365 = vpop.f32.mrf.mxu0
  %v1366 = vadd.f32 %v1109, %v1365
  %v1367 = vpop.f32.mrf.mxu0
  %1368 = vmatprep.mubr.f32.mxu0 %v1187
  %1369 = vmatmul.mubr.f32.gmra.mxu0 %v946
  %v1370 = vpop.f32.mrf.mxu0
  %v1371 = vadd.f32 %v1114, %v1370
  %v1372 = vpop.f32.mrf.mxu0
  %1373 = vdwg.mxu0
  %v1374 = vxor.u32 %v1256, 2147483648
  %v1375 = vxor.u32 %v1261, 2147483648
  %v1376 = vxor.u32 %v1266, 2147483648
  %v1377 = vxor.u32 %v1271, 2147483648
  %v1378 = vxor.u32 %v1276, 2147483648
  %v1379 = vxor.u32 %v1281, 2147483648
  %v1380 = vxor.u32 %v1286, 2147483648
  %v1381 = vxor.u32 %v1291, 2147483648
  %v1382 = vxor.u32 %v1296, 2147483648
  %v1383 = vxor.u32 %v1301, 2147483648
  %v1384 = vxor.u32 %v1306, 2147483648
  %v1385 = vxor.u32 %v1311, 2147483648
  %v1386 = vxor.u32 %v1316, 2147483648
  %v1387 = vxor.u32 %v1321, 2147483648
  %v1388 = vxor.u32 %v1326, 2147483648
  %v1389 = vxor.u32 %v1331, 2147483648
  %v1390 = vxor.u32 %v1336, 2147483648
  %v1391 = vxor.u32 %v1341, 2147483648
  %v1392 = vxor.u32 %v1346, 2147483648
  %v1393 = vxor.u32 %v1351, 2147483648
  %v1394 = vxor.u32 %v1356, 2147483648
  %v1395 = vxor.u32 %v1361, 2147483648
  %v1396 = vxor.u32 %v1366, 2147483648
  %v1397 = vxor.u32 %v1371, 2147483648
  %v1398 = vmul.f32 %v1374, 1.442695
  %v1399 = vpow.pop %v1398
  %v1400 = vmul.f32 %v1375, 1.442695
  %v1401 = vpow.pop %v1400
  %v1402 = vmul.f32 %v1376, 1.442695
  %v1403 = vpow.pop %v1402
  %v1404 = vmul.f32 %v1377, 1.442695
  %v1405 = vpow.pop %v1404
  %v1406 = vmul.f32 %v1378, 1.442695
  %v1407 = vpow.pop %v1406
  %v1408 = vmul.f32 %v1379, 1.442695
  %v1409 = vpow.pop %v1408
  %v1410 = vmul.f32 %v1380, 1.442695
  %v1411 = vpow.pop %v1410
  %v1412 = vmul.f32 %v1381, 1.442695
  %v1413 = vpow.pop %v1412
  %v1414 = vmul.f32 %v1382, 1.442695
  %v1415 = vpow.pop %v1414
  %v1416 = vmul.f32 %v1383, 1.442695
  %v1417 = vpow.pop %v1416
  %v1418 = vmul.f32 %v1384, 1.442695
  %v1419 = vpow.pop %v1418
  %v1420 = vmul.f32 %v1385, 1.442695
  %v1421 = vpow.pop %v1420
  %v1422 = vmul.f32 %v1386, 1.442695
  %v1423 = vpow.pop %v1422
  %v1424 = vmul.f32 %v1387, 1.442695
  %v1425 = vpow.pop %v1424
  %v1426 = vmul.f32 %v1388, 1.442695
  %v1427 = vpow.pop %v1426
  %v1428 = vmul.f32 %v1389, 1.442695
  %v1429 = vpow.pop %v1428
  %v1430 = vmul.f32 %v1390, 1.442695
  %v1431 = vpow.pop %v1430
  %v1432 = vmul.f32 %v1391, 1.442695
  %v1433 = vpow.pop %v1432
  %v1434 = vmul.f32 %v1392, 1.442695
  %v1435 = vpow.pop %v1434
  %v1436 = vmul.f32 %v1393, 1.442695
  %v1437 = vpow.pop %v1436
  %v1438 = vmul.f32 %v1394, 1.442695
  %v1439 = vpow.pop %v1438
  %v1440 = vmul.f32 %v1395, 1.442695
  %v1441 = vpow.pop %v1440
  %v1442 = vmul.f32 %v1396, 1.442695
  %v1443 = vpow.pop %v1442
  %v1444 = vmul.f32 %v1397, 1.442695
  %v1445 = vpow.pop %v1444
  %v1446 = vadd.f32 %v1399, 1.0
  %v1447 = vadd.f32 %v1401, 1.0
  %v1448 = vadd.f32 %v1403, 1.0
  %v1449 = vadd.f32 %v1405, 1.0
  %v1450 = vadd.f32 %v1407, 1.0
  %v1451 = vadd.f32 %v1409, 1.0
  %v1452 = vadd.f32 %v1411, 1.0
  %v1453 = vadd.f32 %v1413, 1.0
  %v1454 = vadd.f32 %v1415, 1.0
  %v1455 = vadd.f32 %v1417, 1.0
  %v1456 = vadd.f32 %v1419, 1.0
  %v1457 = vadd.f32 %v1421, 1.0
  %v1458 = vadd.f32 %v1423, 1.0
  %v1459 = vadd.f32 %v1425, 1.0
  %v1460 = vadd.f32 %v1427, 1.0
  %v1461 = vadd.f32 %v1429, 1.0
  %v1462 = vadd.f32 %v1431, 1.0
  %v1463 = vadd.f32 %v1433, 1.0
  %v1464 = vadd.f32 %v1435, 1.0
  %v1465 = vadd.f32 %v1437, 1.0
  %v1466 = vadd.f32 %v1439, 1.0
  %v1467 = vadd.f32 %v1441, 1.0
  %v1468 = vadd.f32 %v1443, 1.0
  %v1469 = vadd.f32 %v1445, 1.0
  %v1470 = vrcp.pop %v1446
  %v1471 = vmul.f32 1.0, %v1470
  %v1472 = vrcp.pop %v1447
  %v1473 = vmul.f32 1.0, %v1472
  %v1474 = vrcp.pop %v1448
  %v1475 = vmul.f32 1.0, %v1474
  %v1476 = vrcp.pop %v1449
  %v1477 = vmul.f32 1.0, %v1476
  %v1478 = vrcp.pop %v1450
  %v1479 = vmul.f32 1.0, %v1478
  %v1480 = vrcp.pop %v1451
  %v1481 = vmul.f32 1.0, %v1480
  %v1482 = vrcp.pop %v1452
  %v1483 = vmul.f32 1.0, %v1482
  %v1484 = vrcp.pop %v1453
  %v1485 = vmul.f32 1.0, %v1484
  %v1486 = vrcp.pop %v1454
  %v1487 = vmul.f32 1.0, %v1486
  %v1488 = vrcp.pop %v1455
  %v1489 = vmul.f32 1.0, %v1488
  %v1490 = vrcp.pop %v1456
  %v1491 = vmul.f32 1.0, %v1490
  %v1492 = vrcp.pop %v1457
  %v1493 = vmul.f32 1.0, %v1492
  %v1494 = vrcp.pop %v1458
  %v1495 = vmul.f32 1.0, %v1494
  %v1496 = vrcp.pop %v1459
  %v1497 = vmul.f32 1.0, %v1496
  %v1498 = vrcp.pop %v1460
  %v1499 = vmul.f32 1.0, %v1498
  %v1500 = vrcp.pop %v1461
  %v1501 = vmul.f32 1.0, %v1500
  %v1502 = vrcp.pop %v1462
  %v1503 = vmul.f32 1.0, %v1502
  %v1504 = vrcp.pop %v1463
  %v1505 = vmul.f32 1.0, %v1504
  %v1506 = vrcp.pop %v1464
  %v1507 = vmul.f32 1.0, %v1506
  %v1508 = vrcp.pop %v1465
  %v1509 = vmul.f32 1.0, %v1508
  %v1510 = vrcp.pop %v1466
  %v1511 = vmul.f32 1.0, %v1510
  %v1512 = vrcp.pop %v1467
  %v1513 = vmul.f32 1.0, %v1512
  %v1514 = vrcp.pop %v1468
  %v1515 = vmul.f32 1.0, %v1514
  %v1516 = vrcp.pop %v1469
  %v1517 = vmul.f32 1.0, %v1516
  %v1518 = vadd.f32 %v296, %v582
  %v1519 = vadd.f32 %v297, %v583
  %v1520 = vadd.f32 %v298, %v584
  %v1521 = vadd.f32 %v299, %v585
  %v1522 = vadd.f32 %v1518, %v868
  %v1523 = vadd.f32 %v1519, %v869
  %v1524 = vadd.f32 %v1520, %v870
  %v1525 = vadd.f32 %v1521, %v871
  %v1526 = vsub.f32 %v296, %v582
  %v1527 = vsub.f32 %v297, %v583
  %v1528 = vsub.f32 %v298, %v584
  %v1529 = vsub.f32 %v299, %v585
  %v1530 = vsub.f32 %v296, %v868
  %v1531 = vsub.f32 %v297, %v869
  %v1532 = vsub.f32 %v298, %v870
  %v1533 = vsub.f32 %v299, %v871
  %v1534 = vsub.f32 %v582, %v868
  %v1535 = vsub.f32 %v583, %v869
  %v1536 = vsub.f32 %v584, %v870
  %v1537 = vsub.f32 %v585, %v871
  %v1538 = vsub.f32 %v1522, %v296
  %v1539 = vsub.f32 %v1523, %v297
  %v1540 = vsub.f32 %v1524, %v298
  %v1541 = vsub.f32 %v1525, %v299
  %v1542 = vmul.f32 %v1471, %v1526
  %v1543 = vmul.f32 %v1473, %v1527
  %v1544 = vmul.f32 %v1475, %v1528
  %v1545 = vmul.f32 %v1477, %v1529
  %v1546 = vadd.f32 %v1538, %v1542
  %v1547 = vadd.f32 %v1539, %v1543
  %v1548 = vadd.f32 %v1540, %v1544
  %v1549 = vadd.f32 %v1541, %v1545
  %v1550 = vmul.f32 %v1479, %v1530
  %v1551 = vmul.f32 %v1481, %v1531
  %v1552 = vmul.f32 %v1483, %v1532
  %v1553 = vmul.f32 %v1485, %v1533
  %v1554 = vadd.f32 %v1546, %v1550
  %v1555 = vadd.f32 %v1547, %v1551
  %v1556 = vadd.f32 %v1548, %v1552
  %v1557 = vadd.f32 %v1549, %v1553
  %v1558 = vsub.f32 %v1522, %v582
  %v1559 = vsub.f32 %v1523, %v583
  %v1560 = vsub.f32 %v1524, %v584
  %v1561 = vsub.f32 %v1525, %v585
  %v1562 = vmul.f32 %v1487, %v1526
  %v1563 = vmul.f32 %v1489, %v1527
  %v1564 = vmul.f32 %v1491, %v1528
  %v1565 = vmul.f32 %v1493, %v1529
  %v1566 = vsub.f32 %v1558, %v1562
  %v1567 = vsub.f32 %v1559, %v1563
  %v1568 = vsub.f32 %v1560, %v1564
  %v1569 = vsub.f32 %v1561, %v1565
  %v1570 = vmul.f32 %v1495, %v1534
  %v1571 = vmul.f32 %v1497, %v1535
  %v1572 = vmul.f32 %v1499, %v1536
  %v1573 = vmul.f32 %v1501, %v1537
  %v1574 = vadd.f32 %v1566, %v1570
  %v1575 = vadd.f32 %v1567, %v1571
  %v1576 = vadd.f32 %v1568, %v1572
  %v1577 = vadd.f32 %v1569, %v1573
  %v1578 = vsub.f32 %v1522, %v868
  %v1579 = vsub.f32 %v1523, %v869
  %v1580 = vsub.f32 %v1524, %v870
  %v1581 = vsub.f32 %v1525, %v871
  %v1582 = vmul.f32 %v1503, %v1530
  %v1583 = vmul.f32 %v1505, %v1531
  %v1584 = vmul.f32 %v1507, %v1532
  %v1585 = vmul.f32 %v1509, %v1533
  %v1586 = vsub.f32 %v1578, %v1582
  %v1587 = vsub.f32 %v1579, %v1583
  %v1588 = vsub.f32 %v1580, %v1584
  %v1589 = vsub.f32 %v1581, %v1585
  %v1590 = vmul.f32 %v1511, %v1534
  %v1591 = vmul.f32 %v1513, %v1535
  %v1592 = vmul.f32 %v1515, %v1536
  %v1593 = vmul.f32 %v1517, %v1537
  %v1594 = vsub.f32 %v1586, %v1590
  %v1595 = vsub.f32 %v1587, %v1591
  %v1596 = vsub.f32 %v1588, %v1592
  %v1597 = vsub.f32 %v1589, %v1593
  %1598 = vxpose.xlu0.b32.start [1/16] %v1554, 128
  %1599 = vxpose.xlu0.b32.cont [2/16] %v1555, 128
  %1600 = vxpose.xlu0.b32.cont [3/16] %v1556, 128
  %1601 = vxpose.xlu0.b32.cont [4/16] %v1557, 128
  %1602 = vxpose.xlu0.b32.cont [5/16] 0.0, 128
  %1603 = vxpose.xlu0.b32.cont [6/16] 0.0, 128
  %1604 = vxpose.xlu0.b32.cont [7/16] 0.0, 128
  %1605 = vxpose.xlu0.b32.cont [8/16] 0.0, 128
  %1606 = vxpose.xlu0.b32.cont [9/16] 0.0, 128
  %1607 = vxpose.xlu0.b32.cont [10/16] 0.0, 128
  %1608 = vxpose.xlu0.b32.cont [11/16] 0.0, 128
  %1609 = vxpose.xlu0.b32.cont [12/16] 0.0, 128
  %1610 = vxpose.xlu0.b32.cont [13/16] 0.0, 128
  %1611 = vxpose.xlu0.b32.cont [14/16] 0.0, 128
  %1612 = vxpose.xlu0.b32.cont [15/16] 0.0, 128
  %1613 = vxpose.xlu0.b32.end [16/16] 0.0, 128
  %v1614 = vpop.trf.xlu0
  %v1615 = vpop.trf.xlu0
  %v1616 = vpop.trf.xlu0
  %v1617 = vpop.trf.xlu0
  %v1618 = vpop.trf.xlu0
  %v1619 = vpop.trf.xlu0
  %v1620 = vpop.trf.xlu0
  %v1621 = vpop.trf.xlu0
  %v1622 = vpop.trf.xlu0
  %v1623 = vpop.trf.xlu0
  %v1624 = vpop.trf.xlu0
  %v1625 = vpop.trf.xlu0
  %v1626 = vpop.trf.xlu0
  %v1627 = vpop.trf.xlu0
  %v1628 = vpop.trf.xlu0
  %v1629 = vpop.trf.xlu0
  %vm1630 = vcmask 261120
  %1631 = vst.msk [vmem:[%s5] sm:$0xff] %vm1630, %v1614
  %1632 = vst.msk [vmem:[%s5 + $0x8] sm:$0xff] %vm1630, %v1615
  %1633 = vst.msk [vmem:[%s5 + $0x10] sm:$0xff] %vm1630, %v1616
  %1634 = vst.msk [vmem:[%s5 + $0x18] sm:$0xff] %vm1630, %v1617
  %1635 = vst.msk [vmem:[%s5 + $0x20] sm:$0xff] %vm1630, %v1618
  %1636 = vst.msk [vmem:[%s5 + $0x28] sm:$0xff] %vm1630, %v1619
  %1637 = vst.msk [vmem:[%s5 + $0x30] sm:$0xff] %vm1630, %v1620
  %1638 = vst.msk [vmem:[%s5 + $0x38] sm:$0xff] %vm1630, %v1621
  %1639 = vst.msk [vmem:[%s5 + $0x40] sm:$0xff] %vm1630, %v1622
  %1640 = vst.msk [vmem:[%s5 + $0x48] sm:$0xff] %vm1630, %v1623
  %1641 = vst.msk [vmem:[%s5 + $0x50] sm:$0xff] %vm1630, %v1624
  %1642 = vst.msk [vmem:[%s5 + $0x58] sm:$0xff] %vm1630, %v1625
  %1643 = vst.msk [vmem:[%s5 + $0x60] sm:$0xff] %vm1630, %v1626
  %1644 = vst.msk [vmem:[%s5 + $0x68] sm:$0xff] %vm1630, %v1627
  %1645 = vst.msk [vmem:[%s5 + $0x70] sm:$0xff] %vm1630, %v1628
  %1646 = vst.msk [vmem:[%s5 + $0x78] sm:$0xff] %vm1630, %v1629
  %1647 = vxpose.xlu0.b32.start [1/16] %v1574, 128
  %1648 = vxpose.xlu0.b32.cont [2/16] %v1575, 128
  %1649 = vxpose.xlu0.b32.cont [3/16] %v1576, 128
  %1650 = vxpose.xlu0.b32.cont [4/16] %v1577, 128
  %1651 = vxpose.xlu0.b32.cont [5/16] 0.0, 128
  %1652 = vxpose.xlu0.b32.cont [6/16] 0.0, 128
  %1653 = vxpose.xlu0.b32.cont [7/16] 0.0, 128
  %1654 = vxpose.xlu0.b32.cont [8/16] 0.0, 128
  %1655 = vxpose.xlu0.b32.cont [9/16] 0.0, 128
  %1656 = vxpose.xlu0.b32.cont [10/16] 0.0, 128
  %1657 = vxpose.xlu0.b32.cont [11/16] 0.0, 128
  %1658 = vxpose.xlu0.b32.cont [12/16] 0.0, 128
  %1659 = vxpose.xlu0.b32.cont [13/16] 0.0, 128
  %1660 = vxpose.xlu0.b32.cont [14/16] 0.0, 128
  %1661 = vxpose.xlu0.b32.cont [15/16] 0.0, 128
  %1662 = vxpose.xlu0.b32.end [16/16] 0.0, 128
  %v1663 = vpop.trf.xlu0
  %v1664 = vpop.trf.xlu0
  %v1665 = vpop.trf.xlu0
  %v1666 = vpop.trf.xlu0
  %v1667 = vpop.trf.xlu0
  %v1668 = vpop.trf.xlu0
  %v1669 = vpop.trf.xlu0
  %v1670 = vpop.trf.xlu0
  %v1671 = vpop.trf.xlu0
  %v1672 = vpop.trf.xlu0
  %v1673 = vpop.trf.xlu0
  %v1674 = vpop.trf.xlu0
  %v1675 = vpop.trf.xlu0
  %v1676 = vpop.trf.xlu0
  %v1677 = vpop.trf.xlu0
  %v1678 = vpop.trf.xlu0
  %s1679 = scalar_lea.vmem %s5, 128
  %1680 = vst.msk [vmem:[%s1679] sm:$0xff] %vm1630, %v1663
  %1681 = vst.msk [vmem:[%s1679 + $0x8] sm:$0xff] %vm1630, %v1664
  %1682 = vst.msk [vmem:[%s1679 + $0x10] sm:$0xff] %vm1630, %v1665
  %1683 = vst.msk [vmem:[%s1679 + $0x18] sm:$0xff] %vm1630, %v1666
  %1684 = vst.msk [vmem:[%s1679 + $0x20] sm:$0xff] %vm1630, %v1667
  %1685 = vst.msk [vmem:[%s1679 + $0x28] sm:$0xff] %vm1630, %v1668
  %1686 = vst.msk [vmem:[%s1679 + $0x30] sm:$0xff] %vm1630, %v1669
  %1687 = vst.msk [vmem:[%s1679 + $0x38] sm:$0xff] %vm1630, %v1670
  %1688 = vst.msk [vmem:[%s1679 + $0x40] sm:$0xff] %vm1630, %v1671
  %1689 = vst.msk [vmem:[%s1679 + $0x48] sm:$0xff] %vm1630, %v1672
  %1690 = vst.msk [vmem:[%s1679 + $0x50] sm:$0xff] %vm1630, %v1673
  %1691 = vst.msk [vmem:[%s1679 + $0x58] sm:$0xff] %vm1630, %v1674
  %1692 = vst.msk [vmem:[%s1679 + $0x60] sm:$0xff] %vm1630, %v1675
  %1693 = vst.msk [vmem:[%s1679 + $0x68] sm:$0xff] %vm1630, %v1676
  %1694 = vst.msk [vmem:[%s1679 + $0x70] sm:$0xff] %vm1630, %v1677
  %1695 = vst.msk [vmem:[%s1679 + $0x78] sm:$0xff] %vm1630, %v1678
  %1696 = vxpose.xlu0.b32.start [1/16] %v1594, 128
  %1697 = vxpose.xlu0.b32.cont [2/16] %v1595, 128
  %1698 = vxpose.xlu0.b32.cont [3/16] %v1596, 128
  %1699 = vxpose.xlu0.b32.cont [4/16] %v1597, 128
  %1700 = vxpose.xlu0.b32.cont [5/16] 0.0, 128
  %1701 = vxpose.xlu0.b32.cont [6/16] 0.0, 128
  %1702 = vxpose.xlu0.b32.cont [7/16] 0.0, 128
  %1703 = vxpose.xlu0.b32.cont [8/16] 0.0, 128
  %1704 = vxpose.xlu0.b32.cont [9/16] 0.0, 128
  %1705 = vxpose.xlu0.b32.cont [10/16] 0.0, 128
  %1706 = vxpose.xlu0.b32.cont [11/16] 0.0, 128
  %1707 = vxpose.xlu0.b32.cont [12/16] 0.0, 128
  %1708 = vxpose.xlu0.b32.cont [13/16] 0.0, 128
  %1709 = vxpose.xlu0.b32.cont [14/16] 0.0, 128
  %1710 = vxpose.xlu0.b32.cont [15/16] 0.0, 128
  %1711 = vxpose.xlu0.b32.end [16/16] 0.0, 128
  %v1712 = vpop.trf.xlu0
  %v1713 = vpop.trf.xlu0
  %v1714 = vpop.trf.xlu0
  %v1715 = vpop.trf.xlu0
  %v1716 = vpop.trf.xlu0
  %v1717 = vpop.trf.xlu0
  %v1718 = vpop.trf.xlu0
  %v1719 = vpop.trf.xlu0
  %v1720 = vpop.trf.xlu0
  %v1721 = vpop.trf.xlu0
  %v1722 = vpop.trf.xlu0
  %v1723 = vpop.trf.xlu0
  %v1724 = vpop.trf.xlu0
  %v1725 = vpop.trf.xlu0
  %v1726 = vpop.trf.xlu0
  %v1727 = vpop.trf.xlu0
  %s1728 = scalar_lea.vmem %s5, 256
  %1729 = vst.msk [vmem:[%s1728] sm:$0xff] %vm1630, %v1712
  %1730 = vst.msk [vmem:[%s1728 + $0x8] sm:$0xff] %vm1630, %v1713
  %1731 = vst.msk [vmem:[%s1728 + $0x10] sm:$0xff] %vm1630, %v1714
  %1732 = vst.msk [vmem:[%s1728 + $0x18] sm:$0xff] %vm1630, %v1715
  %1733 = vst.msk [vmem:[%s1728 + $0x20] sm:$0xff] %vm1630, %v1716
  %1734 = vst.msk [vmem:[%s1728 + $0x28] sm:$0xff] %vm1630, %v1717
  %1735 = vst.msk [vmem:[%s1728 + $0x30] sm:$0xff] %vm1630, %v1718
  %1736 = vst.msk [vmem:[%s1728 + $0x38] sm:$0xff] %vm1630, %v1719
  %1737 = vst.msk [vmem:[%s1728 + $0x40] sm:$0xff] %vm1630, %v1720
  %1738 = vst.msk [vmem:[%s1728 + $0x48] sm:$0xff] %vm1630, %v1721
  %1739 = vst.msk [vmem:[%s1728 + $0x50] sm:$0xff] %vm1630, %v1722
  %1740 = vst.msk [vmem:[%s1728 + $0x58] sm:$0xff] %vm1630, %v1723
  %1741 = vst.msk [vmem:[%s1728 + $0x60] sm:$0xff] %vm1630, %v1724
  %1742 = vst.msk [vmem:[%s1728 + $0x68] sm:$0xff] %vm1630, %v1725
  %1743 = vst.msk [vmem:[%s1728 + $0x70] sm:$0xff] %vm1630, %v1726
  %1744 = vst.msk [vmem:[%s1728 + $0x78] sm:$0xff] %vm1630, %v1727
  // Predicated region
  $region22: #{tpu_custom_call.1} parent=0 // pred_check
    _
  $region23: #{tpu_custom_call.1} parent=0 // pred_check_branch
    %1746 = sbr.rel (0) target = $region25
  $region24: #{tpu_custom_call.1} parent=0 // pred_region
    _
  $region25: #{tpu_custom_call.1} parent=0 // pred_fallthru
    _
  // Predicated region
  $region26: #{tpu_custom_call.1} parent=0 // pred_check
    _
  $region27: #{tpu_custom_call.1} parent=0 // pred_check_branch
    %1748 = sbr.rel (0) target = $region29
  $region28: #{tpu_custom_call.1} parent=0 // pred_region
    _
  $region29: #{tpu_custom_call.1} parent=0 // pred_fallthru
    _

</llo_original>
